<compile_context>
chip_gen: v5e
topology: v5e:2x2
jax: 0.10.0
libtpu: 0.0.40
codegen_flags: <defaults>
</compile_context>

<pallas_src>
import jax
import jax.numpy as jnp
import numpy as np
from jax import lax
from jax.experimental import pallas as pl
from jax.experimental.pallas import tpu as pltpu


# ----------------------------- model config ---------------------------------
HIDDEN = 32        # hidden_size (scaled down from 128 for the small test)
NUM_KEYS = 24      # num_keys
QUANT_DIM = 1      # lstm0 input size  (fixed by the module)
SEM_DIM = 300      # lstm1 input size  (fixed by the module)
BATCH_TILE = 8     # sublane width; batch is padded/tiled to this


# ------------------------------ Pallas kernel --------------------------------
def log_anomaly_kernel(
    xq_ref,          # (T, TB, 1)    quantitative, time-major
    xs_ref,          # (T, TB, 300)  semantic, time-major
    wq_ref,          # (1, 8H)   fused layer-0 input weights, quantitative stack
    wsem_ref,        # (300, 8H) fused layer-0 input weights, semantic stack
    b0_ref,          # (1, 8H)   fused layer-0 bias
    whh0_ref,        # (2H, 8H)  fused layer-0 recurrent weights (block-diag)
    w1_ref,          # (4H, 8H)  fused layer-1 weights (ih+hh stacked along K)
    b1_ref,          # (1, 8H)   fused layer-1 bias
    fcw_ref,         # (2H, num_keys)
    fcb_ref,         # (1, num_keys)
    out_ref,         # (TB, num_keys)
    proj_ref,        # VMEM scratch (T*TB, 8H): hoisted layer-0 input projection
):
    T, TB, sem_dim = xs_ref.shape
    G = proj_ref.shape[-1]          # 8H (fused gate width for both stacks)
    H2 = G // 4                     # 2H (fused state width)
    H6 = 3 * H2

    # ---- hoisted layer-0 input projection (both stacks), done ONCE ----------
    # semantic: one well-shaped MXU matmul (K=300); quantitative: VPU broadcast.
    xs_flat = xs_ref[...].reshape(T * TB, sem_dim)        # (T*TB, 300)
    xq_flat = xq_ref[...].reshape(T * TB, 1)              # (T*TB, 1)
    proj_ref[...] = (
        jnp.dot(xs_flat, wsem_ref[...], preferred_element_type=jnp.float32)
        + xq_flat * wq_ref[...]
        + b0_ref[...])

    whh0 = whh0_ref[...]
    w1 = w1_ref[...]
    b1 = b1_ref[...]

    def nonlin(gates):
        # fused gate layout: [i | f | o | g], each 2H wide, sub-order [s0|s1]
        # sigmoid(x) = 0.5*(tanh(x/2)+1): single EUP push per sigmoid slab
        sig = 0.5 * (jnp.tanh(0.5 * gates[:, :H6]) + 1.0)
        g = jnp.tanh(gates[:, H6:])
        return sig[:, :H2], sig[:, H2:2 * H2], sig[:, 2 * H2:H6], g

    h0 = jnp.zeros((TB, H2), jnp.float32)   # layer-0 fused state [stack0|stack1]
    c0 = jnp.zeros((TB, H2), jnp.float32)
    h1 = jnp.zeros((TB, H2), jnp.float32)   # layer-1 fused state [stack0|stack1]
    c1 = jnp.zeros((TB, H2), jnp.float32)

    # static unroll (T is small); 2 MXU pushes per step on the serial path
    for t in range(T):
        # ---- layer 0 (both stacks fused): recurrent matmul + hoisted proj ---
        g0 = (proj_ref[pl.ds(t * TB, TB), :]
              + jnp.dot(h0, whh0, preferred_element_type=jnp.float32))
        i, f, o, g = nonlin(g0)
        c0 = f * c0 + i * g
        h0 = o * jnp.tanh(c0)

        # ---- layer 1 (both stacks fused): ih+hh in ONE matmul ---------------
        z = jnp.concatenate([h0, h1], axis=-1)            # (TB, 4H)
        g1 = jnp.dot(z, w1, preferred_element_type=jnp.float32) + b1
        i, f, o, g = nonlin(g1)
        c1 = f * c1 + i * g
        h1 = o * jnp.tanh(c1)

    # h1 == [h_lstm0_layer1_T | h_lstm1_layer1_T] == the original concat
    out = jnp.dot(h1, fcw_ref[...], preferred_element_type=jnp.float32) + fcb_ref[...]
    out_ref[...] = out.astype(out_ref.dtype)


# -------------------------- fused-parameter builder ---------------------------
def fuse_params(params, hidden=HIDDEN):
    """Build block-diagonal / gate-reordered weights for the fused kernel.

    Fused gate column layout (width 8H): [i0 i1 f0 f1 o0 o1 g0 g1], each H wide,
    so i/f/o/g each form a contiguous 2H block aligned with state [stack0|stack1].
    """
    H = hidden

    def gate_blocks(W):                       # (in, 4H) in PyTorch [i,f,g,o] order
        return W[:, :H], W[:, H:2 * H], W[:, 2 * H:3 * H], W[:, 3 * H:4 * H]

    def scatter0(W):                          # place stack0 gates, zero stack1 cols
        i, f, g, o = gate_blocks(W)
        z = jnp.zeros_like(i)
        return jnp.concatenate([i, z, f, z, o, z, g, z], axis=1)

    def scatter1(W):                          # place stack1 gates, zero stack0 cols
        i, f, g, o = gate_blocks(W)
        z = jnp.zeros_like(i)
        return jnp.concatenate([z, i, z, f, z, o, z, g], axis=1)

    def fuse_bias(b0, b1):
        i0, f0, g0, o0 = gate_blocks(b0)
        i1, f1, g1, o1 = gate_blocks(b1)
        return jnp.concatenate([i0, i1, f0, f1, o0, o1, g0, g1], axis=1)

    return {
        "w_q_l0":   scatter0(params["w_ih0_l0"]),                         # (1, 8H)
        "w_sem_l0": scatter1(params["w_ih1_l0"]),                         # (300, 8H)
        "b_l0":     fuse_bias(params["b0_l0"], params["b1_l0"]),          # (1, 8H)
        "w_hh_l0":  jnp.concatenate([scatter0(params["w_hh0_l0"]),
                                     scatter1(params["w_hh1_l0"])], 0),   # (2H, 8H)
        "w_l1":     jnp.concatenate([scatter0(params["w_ih0_l1"]),
                                     scatter1(params["w_ih1_l1"]),
                                     scatter0(params["w_hh0_l1"]),
                                     scatter1(params["w_hh1_l1"])], 0),   # (4H, 8H)
        "b_l1":     fuse_bias(params["b0_l1"], params["b1_l1"]),          # (1, 8H)
        "fc_w":     params["fc_w"],                                       # (2H, K)
        "fc_b":     params["fc_b"],                                       # (1, K)
    }


# ------------------------------ wrapper --------------------------------------
def log_anomaly_forward(semantic, quantitative, fused):
    """semantic: (B, T, 300), quantitative: (B, T, 1) -> (B, num_keys)."""
    B, T, _ = semantic.shape
    TB = BATCH_TILE
    Bp = ((B + TB - 1) // TB) * TB
    pad = Bp - B
    if pad:
        # pad batch to the 8-sublane width; padded rows are sliced off below
        semantic = jnp.pad(semantic, ((0, pad), (0, 0), (0, 0)))
        quantitative = jnp.pad(quantitative, ((0, pad), (0, 0), (0, 0)))

    # time-major layout so each timestep is a contiguous (TB, F) row block
    xs = jnp.transpose(semantic, (1, 0, 2))        # (T, Bp, 300)
    xq = jnp.transpose(quantitative, (1, 0, 2))    # (T, Bp, 1)

    G = fused["b_l0"].shape[1]                     # 8H
    num_keys = fused["fc_w"].shape[1]

    def full_spec(arr):
        nd = arr.ndim
        return pl.BlockSpec(arr.shape, lambda b, nd=nd: (0,) * nd)

    out = pl.pallas_call(
        log_anomaly_kernel,
        out_shape=jax.ShapeDtypeStruct((Bp, num_keys), jnp.float32),
        grid=(Bp // TB,),                          # batch-parallel grid (v7x: 2 TCs)
        in_specs=[
            pl.BlockSpec((T, TB, QUANT_DIM), lambda b: (0, b, 0)),
            pl.BlockSpec((T, TB, SEM_DIM), lambda b: (0, b, 0)),
            full_spec(fused["w_q_l0"]),
            full_spec(fused["w_sem_l0"]),
            full_spec(fused["b_l0"]),
            full_spec(fused["w_hh_l0"]),
            full_spec(fused["w_l1"]),
            full_spec(fused["b_l1"]),
            full_spec(fused["fc_w"]),
            full_spec(fused["fc_b"]),
        ],
        out_specs=pl.BlockSpec((TB, num_keys), lambda b: (b, 0)),
        scratch_shapes=[pltpu.VMEM((T * TB, G), jnp.float32)],
        compiler_params=pltpu.CompilerParams(
            dimension_semantics=("parallel",)),
    )(xq, xs, fused["w_q_l0"], fused["w_sem_l0"], fused["b_l0"],
      fused["w_hh_l0"], fused["w_l1"], fused["b_l1"],
      fused["fc_w"], fused["fc_b"])
    return out[:B]


# ------------------------- deterministic parameters ---------------------------
def init_params(key, hidden=HIDDEN, num_keys=NUM_KEYS):
    H = hidden
    bound = 1.0 / np.sqrt(H)
    names_shapes = [
        ("w_ih0_l0", (QUANT_DIM, 4 * H)), ("w_hh0_l0", (H, 4 * H)), ("b0_l0", (1, 4 * H)),
        ("w_ih0_l1", (H, 4 * H)),         ("w_hh0_l1", (H, 4 * H)), ("b0_l1", (1, 4 * H)),
        ("w_ih1_l0", (SEM_DIM, 4 * H)),   ("w_hh1_l0", (H, 4 * H)), ("b1_l0", (1, 4 * H)),
        ("w_ih1_l1", (H, 4 * H)),         ("w_hh1_l1", (H, 4 * H)), ("b1_l1", (1, 4 * H)),
        ("fc_w", (2 * H, num_keys)),      ("fc_b", (1, num_keys)),
    ]
    params = {}
    keys = jax.random.split(key, len(names_shapes))
    for k, (name, shape) in zip(keys, names_shapes):
        params[name] = jax.random.uniform(
            k, shape, dtype=jnp.float32, minval=-bound, maxval=bound)
    return params


# ------------------------------ pure-JAX reference ----------------------------
def reference_forward(semantic, quantitative, params):
    H = HIDDEN

    def cell(x_t, h, c, w_ih, w_hh, b):
        g = x_t @ w_ih + h @ w_hh + b
        i = jax.nn.sigmoid(g[:, 0 * H:1 * H])
        f = jax.nn.sigmoid(g[:, 1 * H:2 * H])
        gg = jnp.tanh(g[:, 2 * H:3 * H])
        o = jax.nn.sigmoid(g[:, 3 * H:4 * H])
        c = f * c + i * gg
        h = o * jnp.tanh(c)
        return h, c

    def run_stack(x, w_ih_l0, w_hh_l0, b_l0, w_ih_l1, w_hh_l1, b_l1):
        B, T, _ = x.shape
        h0 = c0 = h1 = c1 = jnp.zeros((B, H), jnp.float32)
        for t in range(T):
            h0, c0 = cell(x[:, t, :], h0, c0, w_ih_l0, w_hh_l0, b_l0)
            h1, c1 = cell(h0, h1, c1, w_ih_l1, w_hh_l1, b_l1)
        return h1

    h_q = run_stack(quantitative, params["w_ih0_l0"], params["w_hh0_l0"],
                    params["b0_l0"], params["w_ih0_l1"], params["w_hh0_l1"],
                    params["b0_l1"])
    h_s = run_stack(semantic, params["w_ih1_l0"], params["w_hh1_l0"],
                    params["b1_l0"], params["w_ih1_l1"], params["w_hh1_l1"],
                    params["b1_l1"])
    multi = jnp.concatenate([h_q, h_s], axis=-1)
    return multi @ params["fc_w"] + params["fc_b"]


# ------------------------------------ main ------------------------------------
if __name__ == "__main__":
    key = jax.random.PRNGKey(0)
    k_sem, k_quant, k_params = jax.random.split(key, 3)

    B, T = 2, 8
    semantic = jax.random.normal(k_sem, (B, T, SEM_DIM), dtype=jnp.float32)
    quantitative = jax.random.normal(k_quant, (B, T, QUANT_DIM), dtype=jnp.float32)
    params = init_params(k_params)
    fused = jax.tree_util.tree_map(jax.block_until_ready, fuse_params(params))

    out = log_anomaly_forward(semantic, quantitative, fused)
    out = jax.block_until_ready(out)

    ref = reference_forward(semantic, quantitative, params)
    np.testing.assert_allclose(np.asarray(out), np.asarray(ref),
                               rtol=2e-4, atol=2e-4)
    print("KERNEL_OK")
</pallas_src>

<mosaic_0001>
module attributes {stable_mosaic.version = 11 : i64} {
  func.func @log_anomaly_kernel(%arg0: i32, %arg1: memref<8x8x1xf32, #tpu.memory_space<vmem>>, %arg2: memref<8x8x300xf32, #tpu.memory_space<vmem>>, %arg3: memref<1x256xf32, #tpu.memory_space<vmem>>, %arg4: memref<300x256xf32, #tpu.memory_space<vmem>>, %arg5: memref<1x256xf32, #tpu.memory_space<vmem>>, %arg6: memref<64x256xf32, #tpu.memory_space<vmem>>, %arg7: memref<128x256xf32, #tpu.memory_space<vmem>>, %arg8: memref<1x256xf32, #tpu.memory_space<vmem>>, %arg9: memref<64x24xf32, #tpu.memory_space<vmem>>, %arg10: memref<1x24xf32, #tpu.memory_space<vmem>>, %arg11: memref<8x24xf32, #tpu.memory_space<vmem>>, %arg12: memref<64x256xf32, #tpu.memory_space<vmem>>) attributes {dimension_semantics = [#tpu.dimension_semantics<parallel>], iteration_bounds = array<i64: 1>, scalar_prefetch = 0 : i64, scratch_operands = 1 : i64, tpu.core_type = #tpu.core_type<tc>, window_params = [{transform_indices = @transform_0, window_bounds = array<i64: 8, 8, 1>}, {transform_indices = @transform_1, window_bounds = array<i64: 8, 8, 300>}, {pipeline_mode = #tpu.pipeline_mode<synchronous>, transform_indices = @transform_2, window_bounds = array<i64: 1, 256>}, {pipeline_mode = #tpu.pipeline_mode<synchronous>, transform_indices = @transform_3, window_bounds = array<i64: 300, 256>}, {pipeline_mode = #tpu.pipeline_mode<synchronous>, transform_indices = @transform_4, window_bounds = array<i64: 1, 256>}, {pipeline_mode = #tpu.pipeline_mode<synchronous>, transform_indices = @transform_5, window_bounds = array<i64: 64, 256>}, {pipeline_mode = #tpu.pipeline_mode<synchronous>, transform_indices = @transform_6, window_bounds = array<i64: 128, 256>}, {pipeline_mode = #tpu.pipeline_mode<synchronous>, transform_indices = @transform_7, window_bounds = array<i64: 1, 256>}, {pipeline_mode = #tpu.pipeline_mode<synchronous>, transform_indices = @transform_8, window_bounds = array<i64: 64, 24>}, {pipeline_mode = #tpu.pipeline_mode<synchronous>, transform_indices = @transform_9, window_bounds = array<i64: 1, 24>}, {transform_indices = @transform_10, window_bounds = array<i64: 8, 24>}]} {
    %c0 = arith.constant 0 : index
    %c0_0 = arith.constant 0 : index
    %c0_1 = arith.constant 0 : index
    %0 = vector.load %arg2[%c0, %c0_0, %c0_1] : memref<8x8x300xf32, #tpu.memory_space<vmem>>, vector<8x8x300xf32>
    %1 = vector.shape_cast %0 : vector<8x8x300xf32> to vector<64x300xf32>
    %c0_2 = arith.constant 0 : index
    %c0_3 = arith.constant 0 : index
    %c0_4 = arith.constant 0 : index
    %2 = vector.load %arg1[%c0_2, %c0_3, %c0_4] : memref<8x8x1xf32, #tpu.memory_space<vmem>>, vector<8x8x1xf32>
    %3 = vector.shape_cast %2 : vector<8x8x1xf32> to vector<64x1xf32>
    %c0_5 = arith.constant 0 : index
    %c0_6 = arith.constant 0 : index
    %4 = vector.load %arg4[%c0_5, %c0_6] : memref<300x256xf32, #tpu.memory_space<vmem>>, vector<300x256xf32>
    %cst = arith.constant dense<0.000000e+00> : vector<64x256xf32>
    %5 = tpu.matmul %1, %4, %cst {dimension_numbers = #tpu.dot_dimension_numbers<[1], [0], [0], [1], [0, 0, 1, 1], [], []>} : vector<64x300xf32>, vector<300x256xf32>, vector<64x256xf32> -> vector<64x256xf32>
    %c0_7 = arith.constant 0 : index
    %c0_8 = arith.constant 0 : index
    %6 = vector.load %arg3[%c0_7, %c0_8] : memref<1x256xf32, #tpu.memory_space<vmem>>, vector<1x256xf32>
    %7 = vector.broadcast %3 : vector<64x1xf32> to vector<64x256xf32>
    %8 = vector.broadcast %6 : vector<1x256xf32> to vector<64x256xf32>
    %9 = arith.mulf %7, %8 : vector<64x256xf32>
    %10 = arith.addf %5, %9 : vector<64x256xf32>
    %c0_9 = arith.constant 0 : index
    %c0_10 = arith.constant 0 : index
    %11 = vector.load %arg5[%c0_9, %c0_10] : memref<1x256xf32, #tpu.memory_space<vmem>>, vector<1x256xf32>
    %12 = vector.broadcast %11 : vector<1x256xf32> to vector<64x256xf32>
    %13 = arith.addf %10, %12 : vector<64x256xf32>
    %c0_11 = arith.constant 0 : index
    %c0_12 = arith.constant 0 : index
    %14 = vector.load %arg12[%c0_11, %c0_12] : memref<64x256xf32, #tpu.memory_space<vmem>>, vector<64x256xf32>
    tpu.vector_store %arg12[%c0_11, %c0_12], %13 {strides = array<i32>} : memref<64x256xf32, #tpu.memory_space<vmem>>, vector<64x256xf32>,
    %c0_13 = arith.constant 0 : index
    %c0_14 = arith.constant 0 : index
    %15 = vector.load %arg6[%c0_13, %c0_14] : memref<64x256xf32, #tpu.memory_space<vmem>>, vector<64x256xf32>
    %c0_15 = arith.constant 0 : index
    %c0_16 = arith.constant 0 : index
    %16 = vector.load %arg7[%c0_15, %c0_16] : memref<128x256xf32, #tpu.memory_space<vmem>>, vector<128x256xf32>
    %c0_17 = arith.constant 0 : index
    %c0_18 = arith.constant 0 : index
    %17 = vector.load %arg8[%c0_17, %c0_18] : memref<1x256xf32, #tpu.memory_space<vmem>>, vector<1x256xf32>
    %cst_19 = arith.constant 0.000000e+00 : f32
    %18 = vector.broadcast %cst_19 : f32 to vector<8x64xf32>
    %cst_20 = arith.constant 0.000000e+00 : f32
    %19 = vector.broadcast %cst_20 : f32 to vector<8x64xf32>
    %cst_21 = arith.constant 0.000000e+00 : f32
    %20 = vector.broadcast %cst_21 : f32 to vector<8x64xf32>
    %cst_22 = arith.constant 0.000000e+00 : f32
    %21 = vector.broadcast %cst_22 : f32 to vector<8x64xf32>
    %c0_23 = arith.constant 0 : index
    %c0_24 = arith.constant 0 : index
    %22 = vector.load %arg12[%c0_23, %c0_24] : memref<64x256xf32, #tpu.memory_space<vmem>>, vector<8x256xf32>
    %cst_25 = arith.constant dense<0.000000e+00> : vector<8x256xf32>
    %23 = tpu.matmul %18, %15, %cst_25 {dimension_numbers = #tpu.dot_dimension_numbers<[1], [0], [0], [1], [0, 0, 1, 1], [], []>} : vector<8x64xf32>, vector<64x256xf32>, vector<8x256xf32> -> vector<8x256xf32>
    %24 = arith.addf %22, %23 : vector<8x256xf32>
    %25 = vector.extract_strided_slice %24 {offsets = [0, 0], sizes = [8, 192], strides = [1, 1]} : vector<8x256xf32> to vector<8x192xf32>
    %cst_26 = arith.constant 5.000000e-01 : f32
    %26 = vector.broadcast %cst_26 : f32 to vector<8x192xf32>
    %27 = arith.mulf %26, %25 : vector<8x192xf32>
    %28 = math.tanh %27 : vector<8x192xf32>
    %cst_27 = arith.constant 1.000000e+00 : f32
    %29 = vector.broadcast %cst_27 : f32 to vector<8x192xf32>
    %30 = arith.addf %28, %29 : vector<8x192xf32>
    %cst_28 = arith.constant 5.000000e-01 : f32
    %31 = vector.broadcast %cst_28 : f32 to vector<8x192xf32>
    %32 = arith.mulf %31, %30 : vector<8x192xf32>
    %33 = vector.extract_strided_slice %24 {offsets = [0, 192], sizes = [8, 64], strides = [1, 1]} : vector<8x256xf32> to vector<8x64xf32>
    %34 = math.tanh %33 : vector<8x64xf32>
    %35 = vector.extract_strided_slice %32 {offsets = [0, 0], sizes = [8, 64], strides = [1, 1]} : vector<8x192xf32> to vector<8x64xf32>
    %36 = vector.extract_strided_slice %32 {offsets = [0, 64], sizes = [8, 64], strides = [1, 1]} : vector<8x192xf32> to vector<8x64xf32>
    %37 = vector.extract_strided_slice %32 {offsets = [0, 128], sizes = [8, 64], strides = [1, 1]} : vector<8x192xf32> to vector<8x64xf32>
    %38 = arith.mulf %36, %19 : vector<8x64xf32>
    %39 = arith.mulf %35, %34 : vector<8x64xf32>
    %40 = arith.addf %38, %39 : vector<8x64xf32>
    %41 = math.tanh %40 : vector<8x64xf32>
    %42 = arith.mulf %37, %41 : vector<8x64xf32>
    %43 = tpu.concatenate %42, %20 in 1 : vector<8x64xf32>, vector<8x64xf32> -> vector<8x128xf32>
    %cst_29 = arith.constant dense<0.000000e+00> : vector<8x256xf32>
    %44 = tpu.matmul %43, %16, %cst_29 {dimension_numbers = #tpu.dot_dimension_numbers<[1], [0], [0], [1], [0, 0, 1, 1], [], []>} : vector<8x128xf32>, vector<128x256xf32>, vector<8x256xf32> -> vector<8x256xf32>
    %45 = vector.broadcast %17 : vector<1x256xf32> to vector<8x256xf32>
    %46 = arith.addf %44, %45 : vector<8x256xf32>
    %47 = vector.extract_strided_slice %46 {offsets = [0, 0], sizes = [8, 192], strides = [1, 1]} : vector<8x256xf32> to vector<8x192xf32>
    %cst_30 = arith.constant 5.000000e-01 : f32
    %48 = vector.broadcast %cst_30 : f32 to vector<8x192xf32>
    %49 = arith.mulf %48, %47 : vector<8x192xf32>
    %50 = math.tanh %49 : vector<8x192xf32>
    %cst_31 = arith.constant 1.000000e+00 : f32
    %51 = vector.broadcast %cst_31 : f32 to vector<8x192xf32>
    %52 = arith.addf %50, %51 : vector<8x192xf32>
    %cst_32 = arith.constant 5.000000e-01 : f32
    %53 = vector.broadcast %cst_32 : f32 to vector<8x192xf32>
    %54 = arith.mulf %53, %52 : vector<8x192xf32>
    %55 = vector.extract_strided_slice %46 {offsets = [0, 192], sizes = [8, 64], strides = [1, 1]} : vector<8x256xf32> to vector<8x64xf32>
    %56 = math.tanh %55 : vector<8x64xf32>
    %57 = vector.extract_strided_slice %54 {offsets = [0, 0], sizes = [8, 64], strides = [1, 1]} : vector<8x192xf32> to vector<8x64xf32>
    %58 = vector.extract_strided_slice %54 {offsets = [0, 64], sizes = [8, 64], strides = [1, 1]} : vector<8x192xf32> to vector<8x64xf32>
    %59 = vector.extract_strided_slice %54 {offsets = [0, 128], sizes = [8, 64], strides = [1, 1]} : vector<8x192xf32> to vector<8x64xf32>
    %60 = arith.mulf %58, %21 : vector<8x64xf32>
    %61 = arith.mulf %57, %56 : vector<8x64xf32>
    %62 = arith.addf %60, %61 : vector<8x64xf32>
    %63 = math.tanh %62 : vector<8x64xf32>
    %64 = arith.mulf %59, %63 : vector<8x64xf32>
    %c8 = arith.constant 8 : index
    %c0_33 = arith.constant 0 : index
    %65 = vector.load %arg12[%c8, %c0_33] : memref<64x256xf32, #tpu.memory_space<vmem>>, vector<8x256xf32>
    %cst_34 = arith.constant dense<0.000000e+00> : vector<8x256xf32>
    %66 = tpu.matmul %42, %15, %cst_34 {dimension_numbers = #tpu.dot_dimension_numbers<[1], [0], [0], [1], [0, 0, 1, 1], [], []>} : vector<8x64xf32>, vector<64x256xf32>, vector<8x256xf32> -> vector<8x256xf32>
    %67 = arith.addf %65, %66 : vector<8x256xf32>
    %68 = vector.extract_strided_slice %67 {offsets = [0, 0], sizes = [8, 192], strides = [1, 1]} : vector<8x256xf32> to vector<8x192xf32>
    %cst_35 = arith.constant 5.000000e-01 : f32
    %69 = vector.broadcast %cst_35 : f32 to vector<8x192xf32>
    %70 = arith.mulf %69, %68 : vector<8x192xf32>
    %71 = math.tanh %70 : vector<8x192xf32>
    %cst_36 = arith.constant 1.000000e+00 : f32
    %72 = vector.broadcast %cst_36 : f32 to vector<8x192xf32>
    %73 = arith.addf %71, %72 : vector<8x192xf32>
    %cst_37 = arith.constant 5.000000e-01 : f32
    %74 = vector.broadcast %cst_37 : f32 to vector<8x192xf32>
    %75 = arith.mulf %74, %73 : vector<8x192xf32>
    %76 = vector.extract_strided_slice %67 {offsets = [0, 192], sizes = [8, 64], strides = [1, 1]} : vector<8x256xf32> to vector<8x64xf32>
    %77 = math.tanh %76 : vector<8x64xf32>
    %78 = vector.extract_strided_slice %75 {offsets = [0, 0], sizes = [8, 64], strides = [1, 1]} : vector<8x192xf32> to vector<8x64xf32>
    %79 = vector.extract_strided_slice %75 {offsets = [0, 64], sizes = [8, 64], strides = [1, 1]} : vector<8x192xf32> to vector<8x64xf32>
    %80 = vector.extract_strided_slice %75 {offsets = [0, 128], sizes = [8, 64], strides = [1, 1]} : vector<8x192xf32> to vector<8x64xf32>
    %81 = arith.mulf %79, %40 : vector<8x64xf32>
    %82 = arith.mulf %78, %77 : vector<8x64xf32>
    %83 = arith.addf %81, %82 : vector<8x64xf32>
    %84 = math.tanh %83 : vector<8x64xf32>
    %85 = arith.mulf %80, %84 : vector<8x64xf32>
    %86 = tpu.concatenate %85, %64 in 1 : vector<8x64xf32>, vector<8x64xf32> -> vector<8x128xf32>
    %cst_38 = arith.constant dense<0.000000e+00> : vector<8x256xf32>
    %87 = tpu.matmul %86, %16, %cst_38 {dimension_numbers = #tpu.dot_dimension_numbers<[1], [0], [0], [1], [0, 0, 1, 1], [], []>} : vector<8x128xf32>, vector<128x256xf32>, vector<8x256xf32> -> vector<8x256xf32>
    %88 = vector.broadcast %17 : vector<1x256xf32> to vector<8x256xf32>
    %89 = arith.addf %87, %88 : vector<8x256xf32>
    %90 = vector.extract_strided_slice %89 {offsets = [0, 0], sizes = [8, 192], strides = [1, 1]} : vector<8x256xf32> to vector<8x192xf32>
    %cst_39 = arith.constant 5.000000e-01 : f32
    %91 = vector.broadcast %cst_39 : f32 to vector<8x192xf32>
    %92 = arith.mulf %91, %90 : vector<8x192xf32>
    %93 = math.tanh %92 : vector<8x192xf32>
    %cst_40 = arith.constant 1.000000e+00 : f32
    %94 = vector.broadcast %cst_40 : f32 to vector<8x192xf32>
    %95 = arith.addf %93, %94 : vector<8x192xf32>
    %cst_41 = arith.constant 5.000000e-01 : f32
    %96 = vector.broadcast %cst_41 : f32 to vector<8x192xf32>
    %97 = arith.mulf %96, %95 : vector<8x192xf32>
    %98 = vector.extract_strided_slice %89 {offsets = [0, 192], sizes = [8, 64], strides = [1, 1]} : vector<8x256xf32> to vector<8x64xf32>
    %99 = math.tanh %98 : vector<8x64xf32>
    %100 = vector.extract_strided_slice %97 {offsets = [0, 0], sizes = [8, 64], strides = [1, 1]} : vector<8x192xf32> to vector<8x64xf32>
    %101 = vector.extract_strided_slice %97 {offsets = [0, 64], sizes = [8, 64], strides = [1, 1]} : vector<8x192xf32> to vector<8x64xf32>
    %102 = vector.extract_strided_slice %97 {offsets = [0, 128], sizes = [8, 64], strides = [1, 1]} : vector<8x192xf32> to vector<8x64xf32>
    %103 = arith.mulf %101, %62 : vector<8x64xf32>
    %104 = arith.mulf %100, %99 : vector<8x64xf32>
    %105 = arith.addf %103, %104 : vector<8x64xf32>
    %106 = math.tanh %105 : vector<8x64xf32>
    %107 = arith.mulf %102, %106 : vector<8x64xf32>
    %c16 = arith.constant 16 : index
    %c0_42 = arith.constant 0 : index
    %108 = vector.load %arg12[%c16, %c0_42] : memref<64x256xf32, #tpu.memory_space<vmem>>, vector<8x256xf32>
    %cst_43 = arith.constant dense<0.000000e+00> : vector<8x256xf32>
    %109 = tpu.matmul %85, %15, %cst_43 {dimension_numbers = #tpu.dot_dimension_numbers<[1], [0], [0], [1], [0, 0, 1, 1], [], []>} : vector<8x64xf32>, vector<64x256xf32>, vector<8x256xf32> -> vector<8x256xf32>
    %110 = arith.addf %108, %109 : vector<8x256xf32>
    %111 = vector.extract_strided_slice %110 {offsets = [0, 0], sizes = [8, 192], strides = [1, 1]} : vector<8x256xf32> to vector<8x192xf32>
    %cst_44 = arith.constant 5.000000e-01 : f32
    %112 = vector.broadcast %cst_44 : f32 to vector<8x192xf32>
    %113 = arith.mulf %112, %111 : vector<8x192xf32>
    %114 = math.tanh %113 : vector<8x192xf32>
    %cst_45 = arith.constant 1.000000e+00 : f32
    %115 = vector.broadcast %cst_45 : f32 to vector<8x192xf32>
    %116 = arith.addf %114, %115 : vector<8x192xf32>
    %cst_46 = arith.constant 5.000000e-01 : f32
    %117 = vector.broadcast %cst_46 : f32 to vector<8x192xf32>
    %118 = arith.mulf %117, %116 : vector<8x192xf32>
    %119 = vector.extract_strided_slice %110 {offsets = [0, 192], sizes = [8, 64], strides = [1, 1]} : vector<8x256xf32> to vector<8x64xf32>
    %120 = math.tanh %119 : vector<8x64xf32>
    %121 = vector.extract_strided_slice %118 {offsets = [0, 0], sizes = [8, 64], strides = [1, 1]} : vector<8x192xf32> to vector<8x64xf32>
    %122 = vector.extract_strided_slice %118 {offsets = [0, 64], sizes = [8, 64], strides = [1, 1]} : vector<8x192xf32> to vector<8x64xf32>
    %123 = vector.extract_strided_slice %118 {offsets = [0, 128], sizes = [8, 64], strides = [1, 1]} : vector<8x192xf32> to vector<8x64xf32>
    %124 = arith.mulf %122, %83 : vector<8x64xf32>
    %125 = arith.mulf %121, %120 : vector<8x64xf32>
    %126 = arith.addf %124, %125 : vector<8x64xf32>
    %127 = math.tanh %126 : vector<8x64xf32>
    %128 = arith.mulf %123, %127 : vector<8x64xf32>
    %129 = tpu.concatenate %128, %107 in 1 : vector<8x64xf32>, vector<8x64xf32> -> vector<8x128xf32>
    %cst_47 = arith.constant dense<0.000000e+00> : vector<8x256xf32>
    %130 = tpu.matmul %129, %16, %cst_47 {dimension_numbers = #tpu.dot_dimension_numbers<[1], [0], [0], [1], [0, 0, 1, 1], [], []>} : vector<8x128xf32>, vector<128x256xf32>, vector<8x256xf32> -> vector<8x256xf32>
    %131 = vector.broadcast %17 : vector<1x256xf32> to vector<8x256xf32>
    %132 = arith.addf %130, %131 : vector<8x256xf32>
    %133 = vector.extract_strided_slice %132 {offsets = [0, 0], sizes = [8, 192], strides = [1, 1]} : vector<8x256xf32> to vector<8x192xf32>
    %cst_48 = arith.constant 5.000000e-01 : f32
    %134 = vector.broadcast %cst_48 : f32 to vector<8x192xf32>
    %135 = arith.mulf %134, %133 : vector<8x192xf32>
    %136 = math.tanh %135 : vector<8x192xf32>
    %cst_49 = arith.constant 1.000000e+00 : f32
    %137 = vector.broadcast %cst_49 : f32 to vector<8x192xf32>
    %138 = arith.addf %136, %137 : vector<8x192xf32>
    %cst_50 = arith.constant 5.000000e-01 : f32
    %139 = vector.broadcast %cst_50 : f32 to vector<8x192xf32>
    %140 = arith.mulf %139, %138 : vector<8x192xf32>
    %141 = vector.extract_strided_slice %132 {offsets = [0, 192], sizes = [8, 64], strides = [1, 1]} : vector<8x256xf32> to vector<8x64xf32>
    %142 = math.tanh %141 : vector<8x64xf32>
    %143 = vector.extract_strided_slice %140 {offsets = [0, 0], sizes = [8, 64], strides = [1, 1]} : vector<8x192xf32> to vector<8x64xf32>
    %144 = vector.extract_strided_slice %140 {offsets = [0, 64], sizes = [8, 64], strides = [1, 1]} : vector<8x192xf32> to vector<8x64xf32>
    %145 = vector.extract_strided_slice %140 {offsets = [0, 128], sizes = [8, 64], strides = [1, 1]} : vector<8x192xf32> to vector<8x64xf32>
    %146 = arith.mulf %144, %105 : vector<8x64xf32>
    %147 = arith.mulf %143, %142 : vector<8x64xf32>
    %148 = arith.addf %146, %147 : vector<8x64xf32>
    %149 = math.tanh %148 : vector<8x64xf32>
    %150 = arith.mulf %145, %149 : vector<8x64xf32>
    %c24 = arith.constant 24 : index
    %c0_51 = arith.constant 0 : index
    %151 = vector.load %arg12[%c24, %c0_51] : memref<64x256xf32, #tpu.memory_space<vmem>>, vector<8x256xf32>
    %cst_52 = arith.constant dense<0.000000e+00> : vector<8x256xf32>
    %152 = tpu.matmul %128, %15, %cst_52 {dimension_numbers = #tpu.dot_dimension_numbers<[1], [0], [0], [1], [0, 0, 1, 1], [], []>} : vector<8x64xf32>, vector<64x256xf32>, vector<8x256xf32> -> vector<8x256xf32>
    %153 = arith.addf %151, %152 : vector<8x256xf32>
    %154 = vector.extract_strided_slice %153 {offsets = [0, 0], sizes = [8, 192], strides = [1, 1]} : vector<8x256xf32> to vector<8x192xf32>
    %cst_53 = arith.constant 5.000000e-01 : f32
    %155 = vector.broadcast %cst_53 : f32 to vector<8x192xf32>
    %156 = arith.mulf %155, %154 : vector<8x192xf32>
    %157 = math.tanh %156 : vector<8x192xf32>
    %cst_54 = arith.constant 1.000000e+00 : f32
    %158 = vector.broadcast %cst_54 : f32 to vector<8x192xf32>
    %159 = arith.addf %157, %158 : vector<8x192xf32>
    %cst_55 = arith.constant 5.000000e-01 : f32
    %160 = vector.broadcast %cst_55 : f32 to vector<8x192xf32>
    %161 = arith.mulf %160, %159 : vector<8x192xf32>
    %162 = vector.extract_strided_slice %153 {offsets = [0, 192], sizes = [8, 64], strides = [1, 1]} : vector<8x256xf32> to vector<8x64xf32>
    %163 = math.tanh %162 : vector<8x64xf32>
    %164 = vector.extract_strided_slice %161 {offsets = [0, 0], sizes = [8, 64], strides = [1, 1]} : vector<8x192xf32> to vector<8x64xf32>
    %165 = vector.extract_strided_slice %161 {offsets = [0, 64], sizes = [8, 64], strides = [1, 1]} : vector<8x192xf32> to vector<8x64xf32>
    %166 = vector.extract_strided_slice %161 {offsets = [0, 128], sizes = [8, 64], strides = [1, 1]} : vector<8x192xf32> to vector<8x64xf32>
    %167 = arith.mulf %165, %126 : vector<8x64xf32>
    %168 = arith.mulf %164, %163 : vector<8x64xf32>
    %169 = arith.addf %167, %168 : vector<8x64xf32>
    %170 = math.tanh %169 : vector<8x64xf32>
    %171 = arith.mulf %166, %170 : vector<8x64xf32>
    %172 = tpu.concatenate %171, %150 in 1 : vector<8x64xf32>, vector<8x64xf32> -> vector<8x128xf32>
    %cst_56 = arith.constant dense<0.000000e+00> : vector<8x256xf32>
    %173 = tpu.matmul %172, %16, %cst_56 {dimension_numbers = #tpu.dot_dimension_numbers<[1], [0], [0], [1], [0, 0, 1, 1], [], []>} : vector<8x128xf32>, vector<128x256xf32>, vector<8x256xf32> -> vector<8x256xf32>
    %174 = vector.broadcast %17 : vector<1x256xf32> to vector<8x256xf32>
    %175 = arith.addf %173, %174 : vector<8x256xf32>
    %176 = vector.extract_strided_slice %175 {offsets = [0, 0], sizes = [8, 192], strides = [1, 1]} : vector<8x256xf32> to vector<8x192xf32>
    %cst_57 = arith.constant 5.000000e-01 : f32
    %177 = vector.broadcast %cst_57 : f32 to vector<8x192xf32>
    %178 = arith.mulf %177, %176 : vector<8x192xf32>
    %179 = math.tanh %178 : vector<8x192xf32>
    %cst_58 = arith.constant 1.000000e+00 : f32
    %180 = vector.broadcast %cst_58 : f32 to vector<8x192xf32>
    %181 = arith.addf %179, %180 : vector<8x192xf32>
    %cst_59 = arith.constant 5.000000e-01 : f32
    %182 = vector.broadcast %cst_59 : f32 to vector<8x192xf32>
    %183 = arith.mulf %182, %181 : vector<8x192xf32>
    %184 = vector.extract_strided_slice %175 {offsets = [0, 192], sizes = [8, 64], strides = [1, 1]} : vector<8x256xf32> to vector<8x64xf32>
    %185 = math.tanh %184 : vector<8x64xf32>
    %186 = vector.extract_strided_slice %183 {offsets = [0, 0], sizes = [8, 64], strides = [1, 1]} : vector<8x192xf32> to vector<8x64xf32>
    %187 = vector.extract_strided_slice %183 {offsets = [0, 64], sizes = [8, 64], strides = [1, 1]} : vector<8x192xf32> to vector<8x64xf32>
    %188 = vector.extract_strided_slice %183 {offsets = [0, 128], sizes = [8, 64], strides = [1, 1]} : vector<8x192xf32> to vector<8x64xf32>
    %189 = arith.mulf %187, %148 : vector<8x64xf32>
    %190 = arith.mulf %186, %185 : vector<8x64xf32>
    %191 = arith.addf %189, %190 : vector<8x64xf32>
    %192 = math.tanh %191 : vector<8x64xf32>
    %193 = arith.mulf %188, %192 : vector<8x64xf32>
    %c32 = arith.constant 32 : index
    %c0_60 = arith.constant 0 : index
    %194 = vector.load %arg12[%c32, %c0_60] : memref<64x256xf32, #tpu.memory_space<vmem>>, vector<8x256xf32>
    %cst_61 = arith.constant dense<0.000000e+00> : vector<8x256xf32>
    %195 = tpu.matmul %171, %15, %cst_61 {dimension_numbers = #tpu.dot_dimension_numbers<[1], [0], [0], [1], [0, 0, 1, 1], [], []>} : vector<8x64xf32>, vector<64x256xf32>, vector<8x256xf32> -> vector<8x256xf32>
    %196 = arith.addf %194, %195 : vector<8x256xf32>
    %197 = vector.extract_strided_slice %196 {offsets = [0, 0], sizes = [8, 192], strides = [1, 1]} : vector<8x256xf32> to vector<8x192xf32>
    %cst_62 = arith.constant 5.000000e-01 : f32
    %198 = vector.broadcast %cst_62 : f32 to vector<8x192xf32>
    %199 = arith.mulf %198, %197 : vector<8x192xf32>
    %200 = math.tanh %199 : vector<8x192xf32>
    %cst_63 = arith.constant 1.000000e+00 : f32
    %201 = vector.broadcast %cst_63 : f32 to vector<8x192xf32>
    %202 = arith.addf %200, %201 : vector<8x192xf32>
    %cst_64 = arith.constant 5.000000e-01 : f32
    %203 = vector.broadcast %cst_64 : f32 to vector<8x192xf32>
    %204 = arith.mulf %203, %202 : vector<8x192xf32>
    %205 = vector.extract_strided_slice %196 {offsets = [0, 192], sizes = [8, 64], strides = [1, 1]} : vector<8x256xf32> to vector<8x64xf32>
    %206 = math.tanh %205 : vector<8x64xf32>
    %207 = vector.extract_strided_slice %204 {offsets = [0, 0], sizes = [8, 64], strides = [1, 1]} : vector<8x192xf32> to vector<8x64xf32>
    %208 = vector.extract_strided_slice %204 {offsets = [0, 64], sizes = [8, 64], strides = [1, 1]} : vector<8x192xf32> to vector<8x64xf32>
    %209 = vector.extract_strided_slice %204 {offsets = [0, 128], sizes = [8, 64], strides = [1, 1]} : vector<8x192xf32> to vector<8x64xf32>
    %210 = arith.mulf %208, %169 : vector<8x64xf32>
    %211 = arith.mulf %207, %206 : vector<8x64xf32>
    %212 = arith.addf %210, %211 : vector<8x64xf32>
    %213 = math.tanh %212 : vector<8x64xf32>
    %214 = arith.mulf %209, %213 : vector<8x64xf32>
    %215 = tpu.concatenate %214, %193 in 1 : vector<8x64xf32>, vector<8x64xf32> -> vector<8x128xf32>
    %cst_65 = arith.constant dense<0.000000e+00> : vector<8x256xf32>
    %216 = tpu.matmul %215, %16, %cst_65 {dimension_numbers = #tpu.dot_dimension_numbers<[1], [0], [0], [1], [0, 0, 1, 1], [], []>} : vector<8x128xf32>, vector<128x256xf32>, vector<8x256xf32> -> vector<8x256xf32>
    %217 = vector.broadcast %17 : vector<1x256xf32> to vector<8x256xf32>
    %218 = arith.addf %216, %217 : vector<8x256xf32>
    %219 = vector.extract_strided_slice %218 {offsets = [0, 0], sizes = [8, 192], strides = [1, 1]} : vector<8x256xf32> to vector<8x192xf32>
    %cst_66 = arith.constant 5.000000e-01 : f32
    %220 = vector.broadcast %cst_66 : f32 to vector<8x192xf32>
    %221 = arith.mulf %220, %219 : vector<8x192xf32>
    %222 = math.tanh %221 : vector<8x192xf32>
    %cst_67 = arith.constant 1.000000e+00 : f32
    %223 = vector.broadcast %cst_67 : f32 to vector<8x192xf32>
    %224 = arith.addf %222, %223 : vector<8x192xf32>
    %cst_68 = arith.constant 5.000000e-01 : f32
    %225 = vector.broadcast %cst_68 : f32 to vector<8x192xf32>
    %226 = arith.mulf %225, %224 : vector<8x192xf32>
    %227 = vector.extract_strided_slice %218 {offsets = [0, 192], sizes = [8, 64], strides = [1, 1]} : vector<8x256xf32> to vector<8x64xf32>
    %228 = math.tanh %227 : vector<8x64xf32>
    %229 = vector.extract_strided_slice %226 {offsets = [0, 0], sizes = [8, 64], strides = [1, 1]} : vector<8x192xf32> to vector<8x64xf32>
    %230 = vector.extract_strided_slice %226 {offsets = [0, 64], sizes = [8, 64], strides = [1, 1]} : vector<8x192xf32> to vector<8x64xf32>
    %231 = vector.extract_strided_slice %226 {offsets = [0, 128], sizes = [8, 64], strides = [1, 1]} : vector<8x192xf32> to vector<8x64xf32>
    %232 = arith.mulf %230, %191 : vector<8x64xf32>
    %233 = arith.mulf %229, %228 : vector<8x64xf32>
    %234 = arith.addf %232, %233 : vector<8x64xf32>
    %235 = math.tanh %234 : vector<8x64xf32>
    %236 = arith.mulf %231, %235 : vector<8x64xf32>
    %c40 = arith.constant 40 : index
    %c0_69 = arith.constant 0 : index
    %237 = vector.load %arg12[%c40, %c0_69] : memref<64x256xf32, #tpu.memory_space<vmem>>, vector<8x256xf32>
    %cst_70 = arith.constant dense<0.000000e+00> : vector<8x256xf32>
    %238 = tpu.matmul %214, %15, %cst_70 {dimension_numbers = #tpu.dot_dimension_numbers<[1], [0], [0], [1], [0, 0, 1, 1], [], []>} : vector<8x64xf32>, vector<64x256xf32>, vector<8x256xf32> -> vector<8x256xf32>
    %239 = arith.addf %237, %238 : vector<8x256xf32>
    %240 = vector.extract_strided_slice %239 {offsets = [0, 0], sizes = [8, 192], strides = [1, 1]} : vector<8x256xf32> to vector<8x192xf32>
    %cst_71 = arith.constant 5.000000e-01 : f32
    %241 = vector.broadcast %cst_71 : f32 to vector<8x192xf32>
    %242 = arith.mulf %241, %240 : vector<8x192xf32>
    %243 = math.tanh %242 : vector<8x192xf32>
    %cst_72 = arith.constant 1.000000e+00 : f32
    %244 = vector.broadcast %cst_72 : f32 to vector<8x192xf32>
    %245 = arith.addf %243, %244 : vector<8x192xf32>
    %cst_73 = arith.constant 5.000000e-01 : f32
    %246 = vector.broadcast %cst_73 : f32 to vector<8x192xf32>
    %247 = arith.mulf %246, %245 : vector<8x192xf32>
    %248 = vector.extract_strided_slice %239 {offsets = [0, 192], sizes = [8, 64], strides = [1, 1]} : vector<8x256xf32> to vector<8x64xf32>
    %249 = math.tanh %248 : vector<8x64xf32>
    %250 = vector.extract_strided_slice %247 {offsets = [0, 0], sizes = [8, 64], strides = [1, 1]} : vector<8x192xf32> to vector<8x64xf32>
    %251 = vector.extract_strided_slice %247 {offsets = [0, 64], sizes = [8, 64], strides = [1, 1]} : vector<8x192xf32> to vector<8x64xf32>
    %252 = vector.extract_strided_slice %247 {offsets = [0, 128], sizes = [8, 64], strides = [1, 1]} : vector<8x192xf32> to vector<8x64xf32>
    %253 = arith.mulf %251, %212 : vector<8x64xf32>
    %254 = arith.mulf %250, %249 : vector<8x64xf32>
    %255 = arith.addf %253, %254 : vector<8x64xf32>
    %256 = math.tanh %255 : vector<8x64xf32>
    %257 = arith.mulf %252, %256 : vector<8x64xf32>
    %258 = tpu.concatenate %257, %236 in 1 : vector<8x64xf32>, vector<8x64xf32> -> vector<8x128xf32>
    %cst_74 = arith.constant dense<0.000000e+00> : vector<8x256xf32>
    %259 = tpu.matmul %258, %16, %cst_74 {dimension_numbers = #tpu.dot_dimension_numbers<[1], [0], [0], [1], [0, 0, 1, 1], [], []>} : vector<8x128xf32>, vector<128x256xf32>, vector<8x256xf32> -> vector<8x256xf32>
    %260 = vector.broadcast %17 : vector<1x256xf32> to vector<8x256xf32>
    %261 = arith.addf %259, %260 : vector<8x256xf32>
    %262 = vector.extract_strided_slice %261 {offsets = [0, 0], sizes = [8, 192], strides = [1, 1]} : vector<8x256xf32> to vector<8x192xf32>
    %cst_75 = arith.constant 5.000000e-01 : f32
    %263 = vector.broadcast %cst_75 : f32 to vector<8x192xf32>
    %264 = arith.mulf %263, %262 : vector<8x192xf32>
    %265 = math.tanh %264 : vector<8x192xf32>
    %cst_76 = arith.constant 1.000000e+00 : f32
    %266 = vector.broadcast %cst_76 : f32 to vector<8x192xf32>
    %267 = arith.addf %265, %266 : vector<8x192xf32>
    %cst_77 = arith.constant 5.000000e-01 : f32
    %268 = vector.broadcast %cst_77 : f32 to vector<8x192xf32>
    %269 = arith.mulf %268, %267 : vector<8x192xf32>
    %270 = vector.extract_strided_slice %261 {offsets = [0, 192], sizes = [8, 64], strides = [1, 1]} : vector<8x256xf32> to vector<8x64xf32>
    %271 = math.tanh %270 : vector<8x64xf32>
    %272 = vector.extract_strided_slice %269 {offsets = [0, 0], sizes = [8, 64], strides = [1, 1]} : vector<8x192xf32> to vector<8x64xf32>
    %273 = vector.extract_strided_slice %269 {offsets = [0, 64], sizes = [8, 64], strides = [1, 1]} : vector<8x192xf32> to vector<8x64xf32>
    %274 = vector.extract_strided_slice %269 {offsets = [0, 128], sizes = [8, 64], strides = [1, 1]} : vector<8x192xf32> to vector<8x64xf32>
    %275 = arith.mulf %273, %234 : vector<8x64xf32>
    %276 = arith.mulf %272, %271 : vector<8x64xf32>
    %277 = arith.addf %275, %276 : vector<8x64xf32>
    %278 = math.tanh %277 : vector<8x64xf32>
    %279 = arith.mulf %274, %278 : vector<8x64xf32>
    %c48 = arith.constant 48 : index
    %c0_78 = arith.constant 0 : index
    %280 = vector.load %arg12[%c48, %c0_78] : memref<64x256xf32, #tpu.memory_space<vmem>>, vector<8x256xf32>
    %cst_79 = arith.constant dense<0.000000e+00> : vector<8x256xf32>
    %281 = tpu.matmul %257, %15, %cst_79 {dimension_numbers = #tpu.dot_dimension_numbers<[1], [0], [0], [1], [0, 0, 1, 1], [], []>} : vector<8x64xf32>, vector<64x256xf32>, vector<8x256xf32> -> vector<8x256xf32>
    %282 = arith.addf %280, %281 : vector<8x256xf32>
    %283 = vector.extract_strided_slice %282 {offsets = [0, 0], sizes = [8, 192], strides = [1, 1]} : vector<8x256xf32> to vector<8x192xf32>
    %cst_80 = arith.constant 5.000000e-01 : f32
    %284 = vector.broadcast %cst_80 : f32 to vector<8x192xf32>
    %285 = arith.mulf %284, %283 : vector<8x192xf32>
    %286 = math.tanh %285 : vector<8x192xf32>
    %cst_81 = arith.constant 1.000000e+00 : f32
    %287 = vector.broadcast %cst_81 : f32 to vector<8x192xf32>
    %288 = arith.addf %286, %287 : vector<8x192xf32>
    %cst_82 = arith.constant 5.000000e-01 : f32
    %289 = vector.broadcast %cst_82 : f32 to vector<8x192xf32>
    %290 = arith.mulf %289, %288 : vector<8x192xf32>
    %291 = vector.extract_strided_slice %282 {offsets = [0, 192], sizes = [8, 64], strides = [1, 1]} : vector<8x256xf32> to vector<8x64xf32>
    %292 = math.tanh %291 : vector<8x64xf32>
    %293 = vector.extract_strided_slice %290 {offsets = [0, 0], sizes = [8, 64], strides = [1, 1]} : vector<8x192xf32> to vector<8x64xf32>
    %294 = vector.extract_strided_slice %290 {offsets = [0, 64], sizes = [8, 64], strides = [1, 1]} : vector<8x192xf32> to vector<8x64xf32>
    %295 = vector.extract_strided_slice %290 {offsets = [0, 128], sizes = [8, 64], strides = [1, 1]} : vector<8x192xf32> to vector<8x64xf32>
    %296 = arith.mulf %294, %255 : vector<8x64xf32>
    %297 = arith.mulf %293, %292 : vector<8x64xf32>
    %298 = arith.addf %296, %297 : vector<8x64xf32>
    %299 = math.tanh %298 : vector<8x64xf32>
    %300 = arith.mulf %295, %299 : vector<8x64xf32>
    %301 = tpu.concatenate %300, %279 in 1 : vector<8x64xf32>, vector<8x64xf32> -> vector<8x128xf32>
    %cst_83 = arith.constant dense<0.000000e+00> : vector<8x256xf32>
    %302 = tpu.matmul %301, %16, %cst_83 {dimension_numbers = #tpu.dot_dimension_numbers<[1], [0], [0], [1], [0, 0, 1, 1], [], []>} : vector<8x128xf32>, vector<128x256xf32>, vector<8x256xf32> -> vector<8x256xf32>
    %303 = vector.broadcast %17 : vector<1x256xf32> to vector<8x256xf32>
    %304 = arith.addf %302, %303 : vector<8x256xf32>
    %305 = vector.extract_strided_slice %304 {offsets = [0, 0], sizes = [8, 192], strides = [1, 1]} : vector<8x256xf32> to vector<8x192xf32>
    %cst_84 = arith.constant 5.000000e-01 : f32
    %306 = vector.broadcast %cst_84 : f32 to vector<8x192xf32>
    %307 = arith.mulf %306, %305 : vector<8x192xf32>
    %308 = math.tanh %307 : vector<8x192xf32>
    %cst_85 = arith.constant 1.000000e+00 : f32
    %309 = vector.broadcast %cst_85 : f32 to vector<8x192xf32>
    %310 = arith.addf %308, %309 : vector<8x192xf32>
    %cst_86 = arith.constant 5.000000e-01 : f32
    %311 = vector.broadcast %cst_86 : f32 to vector<8x192xf32>
    %312 = arith.mulf %311, %310 : vector<8x192xf32>
    %313 = vector.extract_strided_slice %304 {offsets = [0, 192], sizes = [8, 64], strides = [1, 1]} : vector<8x256xf32> to vector<8x64xf32>
    %314 = math.tanh %313 : vector<8x64xf32>
    %315 = vector.extract_strided_slice %312 {offsets = [0, 0], sizes = [8, 64], strides = [1, 1]} : vector<8x192xf32> to vector<8x64xf32>
    %316 = vector.extract_strided_slice %312 {offsets = [0, 64], sizes = [8, 64], strides = [1, 1]} : vector<8x192xf32> to vector<8x64xf32>
    %317 = vector.extract_strided_slice %312 {offsets = [0, 128], sizes = [8, 64], strides = [1, 1]} : vector<8x192xf32> to vector<8x64xf32>
    %318 = arith.mulf %316, %277 : vector<8x64xf32>
    %319 = arith.mulf %315, %314 : vector<8x64xf32>
    %320 = arith.addf %318, %319 : vector<8x64xf32>
    %321 = math.tanh %320 : vector<8x64xf32>
    %322 = arith.mulf %317, %321 : vector<8x64xf32>
    %c56 = arith.constant 56 : index
    %c0_87 = arith.constant 0 : index
    %323 = vector.load %arg12[%c56, %c0_87] : memref<64x256xf32, #tpu.memory_space<vmem>>, vector<8x256xf32>
    %cst_88 = arith.constant dense<0.000000e+00> : vector<8x256xf32>
    %324 = tpu.matmul %300, %15, %cst_88 {dimension_numbers = #tpu.dot_dimension_numbers<[1], [0], [0], [1], [0, 0, 1, 1], [], []>} : vector<8x64xf32>, vector<64x256xf32>, vector<8x256xf32> -> vector<8x256xf32>
    %325 = arith.addf %323, %324 : vector<8x256xf32>
    %326 = vector.extract_strided_slice %325 {offsets = [0, 0], sizes = [8, 192], strides = [1, 1]} : vector<8x256xf32> to vector<8x192xf32>
    %cst_89 = arith.constant 5.000000e-01 : f32
    %327 = vector.broadcast %cst_89 : f32 to vector<8x192xf32>
    %328 = arith.mulf %327, %326 : vector<8x192xf32>
    %329 = math.tanh %328 : vector<8x192xf32>
    %cst_90 = arith.constant 1.000000e+00 : f32
    %330 = vector.broadcast %cst_90 : f32 to vector<8x192xf32>
    %331 = arith.addf %329, %330 : vector<8x192xf32>
    %cst_91 = arith.constant 5.000000e-01 : f32
    %332 = vector.broadcast %cst_91 : f32 to vector<8x192xf32>
    %333 = arith.mulf %332, %331 : vector<8x192xf32>
    %334 = vector.extract_strided_slice %325 {offsets = [0, 192], sizes = [8, 64], strides = [1, 1]} : vector<8x256xf32> to vector<8x64xf32>
    %335 = math.tanh %334 : vector<8x64xf32>
    %336 = vector.extract_strided_slice %333 {offsets = [0, 0], sizes = [8, 64], strides = [1, 1]} : vector<8x192xf32> to vector<8x64xf32>
    %337 = vector.extract_strided_slice %333 {offsets = [0, 64], sizes = [8, 64], strides = [1, 1]} : vector<8x192xf32> to vector<8x64xf32>
    %338 = vector.extract_strided_slice %333 {offsets = [0, 128], sizes = [8, 64], strides = [1, 1]} : vector<8x192xf32> to vector<8x64xf32>
    %339 = arith.mulf %337, %298 : vector<8x64xf32>
    %340 = arith.mulf %336, %335 : vector<8x64xf32>
    %341 = arith.addf %339, %340 : vector<8x64xf32>
    %342 = math.tanh %341 : vector<8x64xf32>
    %343 = arith.mulf %338, %342 : vector<8x64xf32>
    %344 = tpu.concatenate %343, %322 in 1 : vector<8x64xf32>, vector<8x64xf32> -> vector<8x128xf32>
    %cst_92 = arith.constant dense<0.000000e+00> : vector<8x256xf32>
    %345 = tpu.matmul %344, %16, %cst_92 {dimension_numbers = #tpu.dot_dimension_numbers<[1], [0], [0], [1], [0, 0, 1, 1], [], []>} : vector<8x128xf32>, vector<128x256xf32>, vector<8x256xf32> -> vector<8x256xf32>
    %346 = vector.broadcast %17 : vector<1x256xf32> to vector<8x256xf32>
    %347 = arith.addf %345, %346 : vector<8x256xf32>
    %348 = vector.extract_strided_slice %347 {offsets = [0, 0], sizes = [8, 192], strides = [1, 1]} : vector<8x256xf32> to vector<8x192xf32>
    %cst_93 = arith.constant 5.000000e-01 : f32
    %349 = vector.broadcast %cst_93 : f32 to vector<8x192xf32>
    %350 = arith.mulf %349, %348 : vector<8x192xf32>
    %351 = math.tanh %350 : vector<8x192xf32>
    %cst_94 = arith.constant 1.000000e+00 : f32
    %352 = vector.broadcast %cst_94 : f32 to vector<8x192xf32>
    %353 = arith.addf %351, %352 : vector<8x192xf32>
    %cst_95 = arith.constant 5.000000e-01 : f32
    %354 = vector.broadcast %cst_95 : f32 to vector<8x192xf32>
    %355 = arith.mulf %354, %353 : vector<8x192xf32>
    %356 = vector.extract_strided_slice %347 {offsets = [0, 192], sizes = [8, 64], strides = [1, 1]} : vector<8x256xf32> to vector<8x64xf32>
    %357 = math.tanh %356 : vector<8x64xf32>
    %358 = vector.extract_strided_slice %355 {offsets = [0, 0], sizes = [8, 64], strides = [1, 1]} : vector<8x192xf32> to vector<8x64xf32>
    %359 = vector.extract_strided_slice %355 {offsets = [0, 64], sizes = [8, 64], strides = [1, 1]} : vector<8x192xf32> to vector<8x64xf32>
    %360 = vector.extract_strided_slice %355 {offsets = [0, 128], sizes = [8, 64], strides = [1, 1]} : vector<8x192xf32> to vector<8x64xf32>
    %361 = arith.mulf %359, %320 : vector<8x64xf32>
    %362 = arith.mulf %358, %357 : vector<8x64xf32>
    %363 = arith.addf %361, %362 : vector<8x64xf32>
    %364 = math.tanh %363 : vector<8x64xf32>
    %365 = arith.mulf %360, %364 : vector<8x64xf32>
    %c0_96 = arith.constant 0 : index
    %c0_97 = arith.constant 0 : index
    %366 = vector.load %arg9[%c0_96, %c0_97] : memref<64x24xf32, #tpu.memory_space<vmem>>, vector<64x24xf32>
    %cst_98 = arith.constant dense<0.000000e+00> : vector<8x24xf32>
    %367 = tpu.matmul %365, %366, %cst_98 {dimension_numbers = #tpu.dot_dimension_numbers<[1], [0], [0], [1], [0, 0, 1, 1], [], []>} : vector<8x64xf32>, vector<64x24xf32>, vector<8x24xf32> -> vector<8x24xf32>
    %c0_99 = arith.constant 0 : index
    %c0_100 = arith.constant 0 : index
    %368 = vector.load %arg10[%c0_99, %c0_100] : memref<1x24xf32, #tpu.memory_space<vmem>>, vector<1x24xf32>
    %369 = vector.broadcast %368 : vector<1x24xf32> to vector<8x24xf32>
    %370 = arith.addf %367, %369 : vector<8x24xf32>
    %c0_101 = arith.constant 0 : index
    %c0_102 = arith.constant 0 : index
    %371 = vector.load %arg11[%c0_101, %c0_102] : memref<8x24xf32, #tpu.memory_space<vmem>>, vector<8x24xf32>
    tpu.vector_store %arg11[%c0_101, %c0_102], %370 {strides = array<i32>} : memref<8x24xf32, #tpu.memory_space<vmem>>, vector<8x24xf32>,
    return
  }
  func.func @transform_0(%arg0: i32) -> (i32, i32, i32) {
    %c0_i32 = arith.constant 0 : i32
    %c0_i32_0 = arith.constant 0 : i32
    %c0_i32_1 = arith.constant 0 : i32
    return %c0_i32, %arg0, %c0_i32_0 : i32, i32, i32
  }
  func.func @transform_1(%arg0: i32) -> (i32, i32, i32) {
    %c0_i32 = arith.constant 0 : i32
    %c0_i32_0 = arith.constant 0 : i32
    %c0_i32_1 = arith.constant 0 : i32
    return %c0_i32, %arg0, %c0_i32_0 : i32, i32, i32
  }
  func.func @transform_2(%arg0: i32) -> (i32, i32) {
    %c0_i32 = arith.constant 0 : i32
    %c0_i32_0 = arith.constant 0 : i32
    %c0_i32_1 = arith.constant 0 : i32
    return %c0_i32, %c0_i32_0 : i32, i32
  }
  func.func @transform_3(%arg0: i32) -> (i32, i32) {
    %c0_i32 = arith.constant 0 : i32
    %c0_i32_0 = arith.constant 0 : i32
    %c0_i32_1 = arith.constant 0 : i32
    return %c0_i32, %c0_i32_0 : i32, i32
  }
  func.func @transform_4(%arg0: i32) -> (i32, i32) {
    %c0_i32 = arith.constant 0 : i32
    %c0_i32_0 = arith.constant 0 : i32
    %c0_i32_1 = arith.constant 0 : i32
    return %c0_i32, %c0_i32_0 : i32, i32
  }
  func.func @transform_5(%arg0: i32) -> (i32, i32) {
    %c0_i32 = arith.constant 0 : i32
    %c0_i32_0 = arith.constant 0 : i32
    %c0_i32_1 = arith.constant 0 : i32
    return %c0_i32, %c0_i32_0 : i32, i32
  }
  func.func @transform_6(%arg0: i32) -> (i32, i32) {
    %c0_i32 = arith.constant 0 : i32
    %c0_i32_0 = arith.constant 0 : i32
    %c0_i32_1 = arith.constant 0 : i32
    return %c0_i32, %c0_i32_0 : i32, i32
  }
  func.func @transform_7(%arg0: i32) -> (i32, i32) {
    %c0_i32 = arith.constant 0 : i32
    %c0_i32_0 = arith.constant 0 : i32
    %c0_i32_1 = arith.constant 0 : i32
    return %c0_i32, %c0_i32_0 : i32, i32
  }
  func.func @transform_8(%arg0: i32) -> (i32, i32) {
    %c0_i32 = arith.constant 0 : i32
    %c0_i32_0 = arith.constant 0 : i32
    %c0_i32_1 = arith.constant 0 : i32
    return %c0_i32, %c0_i32_0 : i32, i32
  }
  func.func @transform_9(%arg0: i32) -> (i32, i32) {
    %c0_i32 = arith.constant 0 : i32
    %c0_i32_0 = arith.constant 0 : i32
    %c0_i32_1 = arith.constant 0 : i32
    return %c0_i32, %c0_i32_0 : i32, i32
  }
  func.func @transform_10(%arg0: i32) -> (i32, i32) {
    %c0_i32 = arith.constant 0 : i32
    %c0_i32_0 = arith.constant 0 : i32
    return %arg0, %c0_i32 : i32, i32
  }
}

</mosaic_0001>

<llo_original>
// kernel: tpu_custom_call.1
$region0: #{tpu_custom_call.1}
  #allocation0 [shape = 'u32[]', space=smem, size = 0x4, offset = 0x4, fixed_abs, tag = 'smem constant byte address 0x4 - core index']
  #allocation1 [shape = 'u32[72,128]{1,0:T(1,128)}', space=vmem, size = 0x9000, scoped, tag = 'internal scratch']
  #allocation2 [shape = 'f32[64,256]{1,0:T(8,128)}', space=vmem, size = 0x10000, scoped, tag = 'scratch operand']
  %s0 = inlined_call_operand.vmem [shape: f32[8,8,1], index: 0, kind: input, shape index: {}]
  %s1 = inlined_call_operand.hbm [shape: f32[8,8,300], index: 1, kind: input, shape index: {}]
  %s2 = inlined_call_operand.vmem [shape: f32[1,256], index: 2, kind: input, shape index: {}]
  %s3 = inlined_call_operand.hbm [shape: f32[300,256], index: 3, kind: input, shape index: {}]
  %s4 = inlined_call_operand.vmem [shape: f32[1,256], index: 4, kind: input, shape index: {}]
  %s5 = inlined_call_operand.vmem [shape: f32[64,256], index: 5, kind: input, shape index: {}]
  %s6 = inlined_call_operand.hbm [shape: f32[128,256], index: 6, kind: input, shape index: {}]
  %s7 = inlined_call_operand.vmem [shape: f32[1,256], index: 7, kind: input, shape index: {}]
  %s8 = inlined_call_operand.vmem [shape: f32[64,24], index: 8, kind: input, shape index: {}]
  %s9 = inlined_call_operand.vmem [shape: f32[1,24], index: 9, kind: input, shape index: {}]
  %s10 = inlined_call_operand.hbm [shape: f32[8,24], index: 10, kind: output, shape index: {}]
  %s11 = sld [smem:[#allocation0]]
  $region62: #{tpu_custom_call.1} parent=0
    _
  %s13 = ssub.s32 1, %s11
  %s14 = scalar_select 0, %s13, %s11
  $region1: #{tpu_custom_call.1} parent=0
    #allocation3 [shape = 'u8[98304]{0}', space=vmem, size = 0x18000, scoped, tag = 'input window, operand 1, single buffered']
    #allocation4 [shape = 's32[1]{0}', space=sflag, size = 0x4, scoped, tag = 'scoped memory for tpu_custom_call.1']
    #allocation5 [shape = 's32[1]{0}', space=sflag, size = 0x4, scoped, tag = 'scoped memory for tpu_custom_call.1']
    #allocation6 [shape = 'u8[311296]{0}', space=vmem, size = 0x4c000, scoped, tag = 'input window, operand 3, single buffered']
    #allocation7 [shape = 's32[1]{0}', space=sflag, size = 0x4, scoped, tag = 'scoped memory for tpu_custom_call.1']
    #allocation8 [shape = 'u8[131072]{0}', space=vmem, size = 0x20000, scoped, tag = 'input window, operand 6, single buffered']
    #allocation9 [shape = 'u8[4096]{0}', space=vmem, size = 0x1000, scoped, tag = 'output window, operand 0, single buffered']
    %15 = vsyncpa [#allocation4], 0
    %16 = vsyncpa [#allocation7], 0
    %17 = vsyncpa [#allocation5], 0
    // Predicated region
    $region2: #{tpu_custom_call.1} parent=1 // pred_check
      _
    $region3: #{tpu_custom_call.1} parent=1 // pred_check_branch
      %19 = sbr.rel (0) target = $region5
    $region4: #{tpu_custom_call.1} parent=1 // pred_region
      _
    $region5: #{tpu_custom_call.1} parent=1 // pred_fallthru
      _
    // Predicated region
    $region6: #{tpu_custom_call.1} parent=1 // pred_check
      _
    $region7: #{tpu_custom_call.1} parent=1 // pred_check_branch
      %21 = sbr.rel (0) target = $region9
    $region8: #{tpu_custom_call.1} parent=1 // pred_region
      %23 = vsyncadd [#allocation4], 0
      %s24 = sshll.u32 %s1, 4
      %s25 = int_to_ptr.hbm [resolvable:$true] %s24
      %s26 = sshll.u32 [#allocation3], 4
      %s27 = int_to_ptr.vmem [resolvable:$true] %s26
      %32 = dma.hbm_to_vmem [thread:$0]  %s25, 3072, %s27, [#allocation4], 384, 384, 24
    $region9: #{tpu_custom_call.1} parent=1 // pred_fallthru
      _
    // Predicated region
    $region10: #{tpu_custom_call.1} parent=1 // pred_check
      _
    $region11: #{tpu_custom_call.1} parent=1 // pred_check_branch
      %34 = sbr.rel (0) target = $region13
    $region12: #{tpu_custom_call.1} parent=1 // pred_region
      _
    $region13: #{tpu_custom_call.1} parent=1 // pred_fallthru
      _
    // Predicated region
    $region14: #{tpu_custom_call.1} parent=1 // pred_check
      _
    $region15: #{tpu_custom_call.1} parent=1 // pred_check_branch
      %36 = sbr.rel (0) target = $region17
    $region16: #{tpu_custom_call.1} parent=1 // pred_region
      %38 = vsyncadd [#allocation7], 0
      %s39 = sshll.u32 %s3, 4
      %s40 = int_to_ptr.hbm [resolvable:$true] %s39
      %s41 = sshll.u32 [#allocation6], 4
      %s42 = int_to_ptr.vmem [resolvable:$true] %s41
      %47 = dma.hbm_to_vmem [thread:$0]  %s40, 9728, %s42, [#allocation7], 256, 256, 16
    $region17: #{tpu_custom_call.1} parent=1 // pred_fallthru
      _
    // Predicated region
    $region18: #{tpu_custom_call.1} parent=1 // pred_check
      _
    $region19: #{tpu_custom_call.1} parent=1 // pred_check_branch
      %49 = sbr.rel (0) target = $region21
    $region20: #{tpu_custom_call.1} parent=1 // pred_region
      _
    $region21: #{tpu_custom_call.1} parent=1 // pred_fallthru
      _
    // Predicated region
    $region22: #{tpu_custom_call.1} parent=1 // pred_check
      _
    $region23: #{tpu_custom_call.1} parent=1 // pred_check_branch
      %51 = sbr.rel (0) target = $region25
    $region24: #{tpu_custom_call.1} parent=1 // pred_region
      _
    $region25: #{tpu_custom_call.1} parent=1 // pred_fallthru
      _
    // Predicated region
    $region26: #{tpu_custom_call.1} parent=1 // pred_check
      _
    $region27: #{tpu_custom_call.1} parent=1 // pred_check_branch
      %53 = sbr.rel (0) target = $region29
    $region28: #{tpu_custom_call.1} parent=1 // pred_region
      %55 = vsyncadd [#allocation7], 0
      %s56 = sshll.u32 %s6, 4
      %s57 = int_to_ptr.hbm [resolvable:$true] %s56
      %s58 = sshll.u32 [#allocation8], 4
      %s59 = int_to_ptr.vmem [resolvable:$true] %s58
      %64 = dma.hbm_to_vmem [thread:$0]  %s57, 4096, %s59, [#allocation7], 256, 256, 16
    $region29: #{tpu_custom_call.1} parent=1 // pred_fallthru
      _
    // Predicated region
    $region30: #{tpu_custom_call.1} parent=1 // pred_check
      _
    $region31: #{tpu_custom_call.1} parent=1 // pred_check_branch
      %66 = sbr.rel (0) target = $region33
    $region32: #{tpu_custom_call.1} parent=1 // pred_region
      _
    $region33: #{tpu_custom_call.1} parent=1 // pred_fallthru
      _
    // Predicated region
    $region34: #{tpu_custom_call.1} parent=1 // pred_check
      _
    $region35: #{tpu_custom_call.1} parent=1 // pred_check_branch
      %68 = sbr.rel (0) target = $region37
    $region36: #{tpu_custom_call.1} parent=1 // pred_region
      _
    $region37: #{tpu_custom_call.1} parent=1 // pred_fallthru
      _
    // Predicated region
    $region38: #{tpu_custom_call.1} parent=1 // pred_check
      _
    $region39: #{tpu_custom_call.1} parent=1 // pred_check_branch
      %70 = sbr.rel (0) target = $region41
    $region40: #{tpu_custom_call.1} parent=1 // pred_region
      _
    $region41: #{tpu_custom_call.1} parent=1 // pred_fallthru
      _
    // Predicated region
    $region42: #{tpu_custom_call.1} parent=1 // pred_check
      _
    $region43: #{tpu_custom_call.1} parent=1 // pred_check_branch
      %72 = sbr.rel (0) target = $region45
    $region44: #{tpu_custom_call.1} parent=1 // pred_region
      %74 = dma.done [#allocation4], 3072
    $region45: #{tpu_custom_call.1} parent=1 // pred_fallthru
      _
    // Predicated region
    $region46: #{tpu_custom_call.1} parent=1 // pred_check
      _
    $region47: #{tpu_custom_call.1} parent=1 // pred_check_branch
      %76 = sbr.rel (0) target = $region49
    $region48: #{tpu_custom_call.1} parent=1 // pred_region
      %78 = dma.done [#allocation7], 9728
    $region49: #{tpu_custom_call.1} parent=1 // pred_fallthru
      _
    // Predicated region
    $region50: #{tpu_custom_call.1} parent=1 // pred_check
      _
    $region51: #{tpu_custom_call.1} parent=1 // pred_check_branch
      %80 = sbr.rel (0) target = $region53
    $region52: #{tpu_custom_call.1} parent=1 // pred_region
      %82 = dma.done [#allocation7], 4096
    $region53: #{tpu_custom_call.1} parent=1 // pred_fallthru
      _
    %v83 = vld [vmem:[#allocation3] sm:$0xff]
    %v84 = vld [vmem:[#allocation3 + $0x8] sm:$0xff]
    %v85 = vld [vmem:[#allocation3 + $0x10] sm:$0xff]
    %v86 = vld [vmem:[#allocation3 + $0x18] sm:$0xff]
    %v87 = vld [vmem:[#allocation3 + $0x20] sm:$0xff]
    %v88 = vld [vmem:[#allocation3 + $0x28] sm:$0xff]
    %v89 = vld [vmem:[#allocation3 + $0x30] sm:$0xff]
    %v90 = vld [vmem:[#allocation3 + $0x38] sm:$0xff]
    %v91 = vld [vmem:[#allocation3 + $0x40] sm:$0xff]
    %v92 = vld [vmem:[#allocation3 + $0x48] sm:$0xff]
    %v93 = vld [vmem:[#allocation3 + $0x50] sm:$0xff]
    %v94 = vld [vmem:[#allocation3 + $0x58] sm:$0xff]
    %v95 = vld [vmem:[#allocation3 + $0x60] sm:$0xff]
    %v96 = vld [vmem:[#allocation3 + $0x68] sm:$0xff]
    %v97 = vld [vmem:[#allocation3 + $0x70] sm:$0xff]
    %v98 = vld [vmem:[#allocation3 + $0x78] sm:$0xff]
    %v99 = vld [vmem:[#allocation3 + $0x80] sm:$0xff]
    %v100 = vld [vmem:[#allocation3 + $0x88] sm:$0xff]
    %v101 = vld [vmem:[#allocation3 + $0x90] sm:$0xff]
    %v102 = vld [vmem:[#allocation3 + $0x98] sm:$0xff]
    %v103 = vld [vmem:[#allocation3 + $0xa0] sm:$0xff]
    %v104 = vld [vmem:[#allocation3 + $0xa8] sm:$0xff]
    %v105 = vld [vmem:[#allocation3 + $0xb0] sm:$0xff]
    %v106 = vld [vmem:[#allocation3 + $0xb8] sm:$0xff]
    %v107 = vld [vmem:[%s0] sm:$0xff]
    %v108 = vld [vmem:[%s0 + $0x8] sm:$0xff]
    %v109 = vld [vmem:[%s0 + $0x10] sm:$0xff]
    %v110 = vld [vmem:[%s0 + $0x18] sm:$0xff]
    %v111 = vld [vmem:[%s0 + $0x20] sm:$0xff]
    %v112 = vld [vmem:[%s0 + $0x28] sm:$0xff]
    %v113 = vld [vmem:[%s0 + $0x30] sm:$0xff]
    %v114 = vld [vmem:[%s0 + $0x38] sm:$0xff]
    %v115 = vld [vmem:[#allocation6] sm:$0xff]
    %v116 = vld [vmem:[#allocation6 + $0x8] sm:$0xff]
    %v117 = vld [vmem:[#allocation6 + $0x10] sm:$0xff]
    %v118 = vld [vmem:[#allocation6 + $0x18] sm:$0xff]
    %v119 = vld [vmem:[#allocation6 + $0x20] sm:$0xff]
    %v120 = vld [vmem:[#allocation6 + $0x28] sm:$0xff]
    %v121 = vld [vmem:[#allocation6 + $0x30] sm:$0xff]
    %v122 = vld [vmem:[#allocation6 + $0x38] sm:$0xff]
    %v123 = vld [vmem:[#allocation6 + $0x40] sm:$0xff]
    %v124 = vld [vmem:[#allocation6 + $0x48] sm:$0xff]
    %v125 = vld [vmem:[#allocation6 + $0x50] sm:$0xff]
    %v126 = vld [vmem:[#allocation6 + $0x58] sm:$0xff]
    %v127 = vld [vmem:[#allocation6 + $0x60] sm:$0xff]
    %v128 = vld [vmem:[#allocation6 + $0x68] sm:$0xff]
    %v129 = vld [vmem:[#allocation6 + $0x70] sm:$0xff]
    %v130 = vld [vmem:[#allocation6 + $0x78] sm:$0xff]
    %v131 = vld [vmem:[#allocation6 + $0x80] sm:$0xff]
    %v132 = vld [vmem:[#allocation6 + $0x88] sm:$0xff]
    %v133 = vld [vmem:[#allocation6 + $0x90] sm:$0xff]
    %v134 = vld [vmem:[#allocation6 + $0x98] sm:$0xff]
    %v135 = vld [vmem:[#allocation6 + $0xa0] sm:$0xff]
    %v136 = vld [vmem:[#allocation6 + $0xa8] sm:$0xff]
    %v137 = vld [vmem:[#allocation6 + $0xb0] sm:$0xff]
    %v138 = vld [vmem:[#allocation6 + $0xb8] sm:$0xff]
    %v139 = vld [vmem:[#allocation6 + $0xc0] sm:$0xff]
    %v140 = vld [vmem:[#allocation6 + $0xc8] sm:$0xff]
    %v141 = vld [vmem:[#allocation6 + $0xd0] sm:$0xff]
    %v142 = vld [vmem:[#allocation6 + $0xd8] sm:$0xff]
    %v143 = vld [vmem:[#allocation6 + $0xe0] sm:$0xff]
    %v144 = vld [vmem:[#allocation6 + $0xe8] sm:$0xff]
    %v145 = vld [vmem:[#allocation6 + $0xf0] sm:$0xff]
    %v146 = vld [vmem:[#allocation6 + $0xf8] sm:$0xff]
    %v147 = vld [vmem:[#allocation6 + $0x100] sm:$0xff]
    %v148 = vld [vmem:[#allocation6 + $0x108] sm:$0xff]
    %v149 = vld [vmem:[#allocation6 + $0x110] sm:$0xff]
    %v150 = vld [vmem:[#allocation6 + $0x118] sm:$0xff]
    %v151 = vld [vmem:[#allocation6 + $0x120] sm:$0xff]
    %v152 = vld [vmem:[#allocation6 + $0x128] sm:$0xff]
    %v153 = vld [vmem:[#allocation6 + $0x130] sm:$0xff]
    %v154 = vld [vmem:[#allocation6 + $0x138] sm:$0xff]
    %v155 = vld [vmem:[#allocation6 + $0x140] sm:$0xff]
    %v156 = vld [vmem:[#allocation6 + $0x148] sm:$0xff]
    %v157 = vld [vmem:[#allocation6 + $0x150] sm:$0xff]
    %v158 = vld [vmem:[#allocation6 + $0x158] sm:$0xff]
    %v159 = vld [vmem:[#allocation6 + $0x160] sm:$0xff]
    %v160 = vld [vmem:[#allocation6 + $0x168] sm:$0xff]
    %v161 = vld [vmem:[#allocation6 + $0x170] sm:$0xff]
    %v162 = vld [vmem:[#allocation6 + $0x178] sm:$0xff]
    %v163 = vld [vmem:[#allocation6 + $0x180] sm:$0xff]
    %v164 = vld [vmem:[#allocation6 + $0x188] sm:$0xff]
    %v165 = vld [vmem:[#allocation6 + $0x190] sm:$0xff]
    %v166 = vld [vmem:[#allocation6 + $0x198] sm:$0xff]
    %v167 = vld [vmem:[#allocation6 + $0x1a0] sm:$0xff]
    %v168 = vld [vmem:[#allocation6 + $0x1a8] sm:$0xff]
    %v169 = vld [vmem:[#allocation6 + $0x1b0] sm:$0xff]
    %v170 = vld [vmem:[#allocation6 + $0x1b8] sm:$0xff]
    %v171 = vld [vmem:[#allocation6 + $0x1c0] sm:$0xff]
    %v172 = vld [vmem:[#allocation6 + $0x1c8] sm:$0xff]
    %v173 = vld [vmem:[#allocation6 + $0x1d0] sm:$0xff]
    %v174 = vld [vmem:[#allocation6 + $0x1d8] sm:$0xff]
    %v175 = vld [vmem:[#allocation6 + $0x1e0] sm:$0xff]
    %v176 = vld [vmem:[#allocation6 + $0x1e8] sm:$0xff]
    %v177 = vld [vmem:[#allocation6 + $0x1f0] sm:$0xff]
    %v178 = vld [vmem:[#allocation6 + $0x1f8] sm:$0xff]
    %v179 = vld [vmem:[#allocation6 + $0x200] sm:$0xff]
    %v180 = vld [vmem:[#allocation6 + $0x208] sm:$0xff]
    %v181 = vld [vmem:[#allocation6 + $0x210] sm:$0xff]
    %v182 = vld [vmem:[#allocation6 + $0x218] sm:$0xff]
    %v183 = vld [vmem:[#allocation6 + $0x220] sm:$0xff]
    %v184 = vld [vmem:[#allocation6 + $0x228] sm:$0xff]
    %v185 = vld [vmem:[#allocation6 + $0x230] sm:$0xff]
    %v186 = vld [vmem:[#allocation6 + $0x238] sm:$0xff]
    %v187 = vld [vmem:[#allocation6 + $0x240] sm:$0xff]
    %v188 = vld [vmem:[#allocation6 + $0x248] sm:$0xff]
    %v189 = vld [vmem:[#allocation6 + $0x250] sm:$0xf]
    %v190 = vld [vmem:[#allocation6 + $0x258] sm:$0xf]
    %v191 = vld [vmem:[%s2] sm:$0x3]
    %193 = vset.pattern.permute.xlu0 0
    %194 = vperm.xlu0 %193, %v107
    %v195 = vpop.permute.xlu0 %194
    %198 = vset.pattern.permute.xlu0 0
    %199 = vperm.xlu0 %198, %v108
    %v200 = vpop.permute.xlu0 %199
    %203 = vset.pattern.permute.xlu0 0
    %204 = vperm.xlu0 %203, %v109
    %v205 = vpop.permute.xlu0 %204
    %208 = vset.pattern.permute.xlu0 0
    %209 = vperm.xlu0 %208, %v110
    %v210 = vpop.permute.xlu0 %209
    %213 = vset.pattern.permute.xlu0 0
    %214 = vperm.xlu0 %213, %v111
    %v215 = vpop.permute.xlu0 %214
    %218 = vset.pattern.permute.xlu0 0
    %219 = vperm.xlu0 %218, %v112
    %v220 = vpop.permute.xlu0 %219
    %223 = vset.pattern.permute.xlu0 0
    %224 = vperm.xlu0 %223, %v113
    %v225 = vpop.permute.xlu0 %224
    %228 = vset.pattern.permute.xlu0 0
    %229 = vperm.xlu0 %228, %v114
    %v230 = vpop.permute.xlu0 %229
    %v233 = vperm.slane %v191, 0
    %v234 = vperm.slane %v191, 1
    %v237 = vmul.f32 %v195, %v233
    %v238 = vmul.f32 %v195, %v234
    %v239 = vmul.f32 %v200, %v233
    %v240 = vmul.f32 %v200, %v234
    %v241 = vmul.f32 %v205, %v233
    %v242 = vmul.f32 %v205, %v234
    %v243 = vmul.f32 %v210, %v233
    %v244 = vmul.f32 %v210, %v234
    %v245 = vmul.f32 %v215, %v233
    %v246 = vmul.f32 %v215, %v234
    %v247 = vmul.f32 %v220, %v233
    %v248 = vmul.f32 %v220, %v234
    %v249 = vmul.f32 %v225, %v233
    %v250 = vmul.f32 %v225, %v234
    %v251 = vmul.f32 %v230, %v233
    %v252 = vmul.f32 %v230, %v234
    %vm253 = vcmask 359424
    %v255 = vsel %vm253, %v85, 0
    %v258 = vsel %vm253, %v88, 0
    %v261 = vsel %vm253, %v91, 0
    %v264 = vsel %vm253, %v94, 0
    %v267 = vsel %vm253, %v97, 0
    %v270 = vsel %vm253, %v100, 0
    %v273 = vsel %vm253, %v103, 0
    %v276 = vsel %vm253, %v106, 0
    %vm278 = vcmask 1043456
    %v280 = vsel %vm278, %v189, 0
    %v283 = vsel %vm278, %v190, 0
    %285 = vmatpush.msra.mxu0 %v145
    %286 = vmatpush.msra.mxu0 %v143
    %287 = vmatpush.msra.mxu0 %v141
    %288 = vmatpush.msra.mxu0 %v139
    %289 = vmatpush.msra.mxu0 %v137
    %290 = vmatpush.msra.mxu0 %v135
    %291 = vmatpush.msra.mxu0 %v133
    %292 = vmatpush.msra.mxu0 %v131
    %293 = vmatpush.msra.mxu0 %v129
    %294 = vmatpush.msra.mxu0 %v127
    %295 = vmatpush.msra.mxu0 %v125
    %296 = vmatpush.msra.mxu0 %v123
    %297 = vmatpush.msra.mxu0 %v121
    %298 = vmatpush.msra.mxu0 %v119
    %299 = vmatpush.msra.mxu0 %v117
    %300 = vmatpush.msra.mxu0 %v115
    %301 = vmatmul.f32.gmra.mxu0 %v83
    %v302 = vpop.f32.mrf.mxu0
    %v303 = vadd.f32 %v237, %v302
    %304 = vmatmul.f32.gmra.mxu0 %v86
    %v305 = vpop.f32.mrf.mxu0
    %v306 = vadd.f32 %v239, %v305
    %307 = vmatmul.f32.gmra.mxu0 %v89
    %v308 = vpop.f32.mrf.mxu0
    %v309 = vadd.f32 %v241, %v308
    %310 = vmatmul.f32.gmra.mxu0 %v92
    %v311 = vpop.f32.mrf.mxu0
    %v312 = vadd.f32 %v243, %v311
    %313 = vmatmul.f32.gmra.mxu0 %v95
    %v314 = vpop.f32.mrf.mxu0
    %v315 = vadd.f32 %v245, %v314
    %316 = vmatmul.f32.gmra.mxu0 %v98
    %v317 = vpop.f32.mrf.mxu0
    %v318 = vadd.f32 %v247, %v317
    %319 = vmatmul.f32.gmra.mxu0 %v101
    %v320 = vpop.f32.mrf.mxu0
    %v321 = vadd.f32 %v249, %v320
    %322 = vmatmul.f32.gmra.mxu0 %v104
    %v323 = vpop.f32.mrf.mxu0
    %v324 = vadd.f32 %v251, %v323
    %325 = vdwg.mxu0
    %326 = vmatpush.msra.mxu0 %v177
    %327 = vmatpush.msra.mxu0 %v175
    %328 = vmatpush.msra.mxu0 %v173
    %329 = vmatpush.msra.mxu0 %v171
    %330 = vmatpush.msra.mxu0 %v169
    %331 = vmatpush.msra.mxu0 %v167
    %332 = vmatpush.msra.mxu0 %v165
    %333 = vmatpush.msra.mxu0 %v163
    %334 = vmatpush.msra.mxu0 %v161
    %335 = vmatpush.msra.mxu0 %v159
    %336 = vmatpush.msra.mxu0 %v157
    %337 = vmatpush.msra.mxu0 %v155
    %338 = vmatpush.msra.mxu0 %v153
    %339 = vmatpush.msra.mxu0 %v151
    %340 = vmatpush.msra.mxu0 %v149
    %341 = vmatpush.msra.mxu0 %v147
    %342 = vmatmul.f32.gmra.mxu0 %v84
    %v343 = vpop.f32.mrf.mxu0
    %v344 = vadd.f32 %v303, %v343
    %345 = vmatmul.f32.gmra.mxu0 %v87
    %v346 = vpop.f32.mrf.mxu0
    %v347 = vadd.f32 %v306, %v346
    %348 = vmatmul.f32.gmra.mxu0 %v90
    %v349 = vpop.f32.mrf.mxu0
    %v350 = vadd.f32 %v309, %v349
    %351 = vmatmul.f32.gmra.mxu0 %v93
    %v352 = vpop.f32.mrf.mxu0
    %v353 = vadd.f32 %v312, %v352
    %354 = vmatmul.f32.gmra.mxu0 %v96
    %v355 = vpop.f32.mrf.mxu0
    %v356 = vadd.f32 %v315, %v355
    %357 = vmatmul.f32.gmra.mxu0 %v99
    %v358 = vpop.f32.mrf.mxu0
    %v359 = vadd.f32 %v318, %v358
    %360 = vmatmul.f32.gmra.mxu0 %v102
    %v361 = vpop.f32.mrf.mxu0
    %v362 = vadd.f32 %v321, %v361
    %363 = vmatmul.f32.gmra.mxu0 %v105
    %v364 = vpop.f32.mrf.mxu0
    %v365 = vadd.f32 %v324, %v364
    %366 = vdwg.mxu0
    %367 = vmatpush.msra.mxu0 0.0
    %368 = vmatpush.msra.mxu0 0.0
    %369 = vmatpush.msra.mxu0 0.0
    %370 = vmatpush.msra.mxu0 0.0
    %371 = vmatpush.msra.mxu0 0.0
    %372 = vmatpush.msra.mxu0 0.0
    %373 = vmatpush.msra.mxu0 0.0
    %374 = vmatpush.msra.mxu0 0.0
    %375 = vmatpush.msra.mxu0 0.0
    %376 = vmatpush.msra.mxu0 0.0
    %377 = vmatpush.msra.mxu0 %v280
    %378 = vmatpush.msra.mxu0 %v187
    %379 = vmatpush.msra.mxu0 %v185
    %380 = vmatpush.msra.mxu0 %v183
    %381 = vmatpush.msra.mxu0 %v181
    %382 = vmatpush.msra.mxu0 %v179
    %383 = vmatmul.f32.gmra.mxu0 %v255
    %v384 = vpop.f32.mrf.mxu0
    %v385 = vadd.f32 %v344, %v384
    %386 = vmatmul.f32.gmra.mxu0 %v258
    %v387 = vpop.f32.mrf.mxu0
    %v388 = vadd.f32 %v347, %v387
    %389 = vmatmul.f32.gmra.mxu0 %v261
    %v390 = vpop.f32.mrf.mxu0
    %v391 = vadd.f32 %v350, %v390
    %392 = vmatmul.f32.gmra.mxu0 %v264
    %v393 = vpop.f32.mrf.mxu0
    %v394 = vadd.f32 %v353, %v393
    %395 = vmatmul.f32.gmra.mxu0 %v267
    %v396 = vpop.f32.mrf.mxu0
    %v397 = vadd.f32 %v356, %v396
    %398 = vmatmul.f32.gmra.mxu0 %v270
    %v399 = vpop.f32.mrf.mxu0
    %v400 = vadd.f32 %v359, %v399
    %401 = vmatmul.f32.gmra.mxu0 %v273
    %v402 = vpop.f32.mrf.mxu0
    %v403 = vadd.f32 %v362, %v402
    %404 = vmatmul.f32.gmra.mxu0 %v276
    %v405 = vpop.f32.mrf.mxu0
    %v406 = vadd.f32 %v365, %v405
    %407 = vdwg.mxu0
    %408 = vmatpush.msra.mxu0 %v146
    %409 = vmatpush.msra.mxu0 %v144
    %410 = vmatpush.msra.mxu0 %v142
    %411 = vmatpush.msra.mxu0 %v140
    %412 = vmatpush.msra.mxu0 %v138
    %413 = vmatpush.msra.mxu0 %v136
    %414 = vmatpush.msra.mxu0 %v134
    %415 = vmatpush.msra.mxu0 %v132
    %416 = vmatpush.msra.mxu0 %v130
    %417 = vmatpush.msra.mxu0 %v128
    %418 = vmatpush.msra.mxu0 %v126
    %419 = vmatpush.msra.mxu0 %v124
    %420 = vmatpush.msra.mxu0 %v122
    %421 = vmatpush.msra.mxu0 %v120
    %422 = vmatpush.msra.mxu0 %v118
    %423 = vmatpush.msra.mxu0 %v116
    %424 = vmatmul.f32.gmra.mxu0 %v83
    %v425 = vpop.f32.mrf.mxu0
    %v426 = vadd.f32 %v238, %v425
    %427 = vmatmul.f32.gmra.mxu0 %v86
    %v428 = vpop.f32.mrf.mxu0
    %v429 = vadd.f32 %v240, %v428
    %430 = vmatmul.f32.gmra.mxu0 %v89
    %v431 = vpop.f32.mrf.mxu0
    %v432 = vadd.f32 %v242, %v431
    %433 = vmatmul.f32.gmra.mxu0 %v92
    %v434 = vpop.f32.mrf.mxu0
    %v435 = vadd.f32 %v244, %v434
    %436 = vmatmul.f32.gmra.mxu0 %v95
    %v437 = vpop.f32.mrf.mxu0
    %v438 = vadd.f32 %v246, %v437
    %439 = vmatmul.f32.gmra.mxu0 %v98
    %v440 = vpop.f32.mrf.mxu0
    %v441 = vadd.f32 %v248, %v440
    %442 = vmatmul.f32.gmra.mxu0 %v101
    %v443 = vpop.f32.mrf.mxu0
    %v444 = vadd.f32 %v250, %v443
    %445 = vmatmul.f32.gmra.mxu0 %v104
    %v446 = vpop.f32.mrf.mxu0
    %v447 = vadd.f32 %v252, %v446
    %448 = vdwg.mxu0
    %449 = vmatpush.msra.mxu0 %v178
    %450 = vmatpush.msra.mxu0 %v176
    %451 = vmatpush.msra.mxu0 %v174
    %452 = vmatpush.msra.mxu0 %v172
    %453 = vmatpush.msra.mxu0 %v170
    %454 = vmatpush.msra.mxu0 %v168
    %455 = vmatpush.msra.mxu0 %v166
    %456 = vmatpush.msra.mxu0 %v164
    %457 = vmatpush.msra.mxu0 %v162
    %458 = vmatpush.msra.mxu0 %v160
    %459 = vmatpush.msra.mxu0 %v158
    %460 = vmatpush.msra.mxu0 %v156
    %461 = vmatpush.msra.mxu0 %v154
    %462 = vmatpush.msra.mxu0 %v152
    %463 = vmatpush.msra.mxu0 %v150
    %464 = vmatpush.msra.mxu0 %v148
    %465 = vmatmul.f32.gmra.mxu0 %v84
    %v466 = vpop.f32.mrf.mxu0
    %v467 = vadd.f32 %v426, %v466
    %468 = vmatmul.f32.gmra.mxu0 %v87
    %v469 = vpop.f32.mrf.mxu0
    %v470 = vadd.f32 %v429, %v469
    %471 = vmatmul.f32.gmra.mxu0 %v90
    %v472 = vpop.f32.mrf.mxu0
    %v473 = vadd.f32 %v432, %v472
    %474 = vmatmul.f32.gmra.mxu0 %v93
    %v475 = vpop.f32.mrf.mxu0
    %v476 = vadd.f32 %v435, %v475
    %477 = vmatmul.f32.gmra.mxu0 %v96
    %v478 = vpop.f32.mrf.mxu0
    %v479 = vadd.f32 %v438, %v478
    %480 = vmatmul.f32.gmra.mxu0 %v99
    %v481 = vpop.f32.mrf.mxu0
    %v482 = vadd.f32 %v441, %v481
    %483 = vmatmul.f32.gmra.mxu0 %v102
    %v484 = vpop.f32.mrf.mxu0
    %v485 = vadd.f32 %v444, %v484
    %486 = vmatmul.f32.gmra.mxu0 %v105
    %v487 = vpop.f32.mrf.mxu0
    %v488 = vadd.f32 %v447, %v487
    %489 = vdwg.mxu0
    %490 = vmatpush.msra.mxu0 0.0
    %491 = vmatpush.msra.mxu0 0.0
    %492 = vmatpush.msra.mxu0 0.0
    %493 = vmatpush.msra.mxu0 0.0
    %494 = vmatpush.msra.mxu0 0.0
    %495 = vmatpush.msra.mxu0 0.0
    %496 = vmatpush.msra.mxu0 0.0
    %497 = vmatpush.msra.mxu0 0.0
    %498 = vmatpush.msra.mxu0 0.0
    %499 = vmatpush.msra.mxu0 0.0
    %500 = vmatpush.msra.mxu0 %v283
    %501 = vmatpush.msra.mxu0 %v188
    %502 = vmatpush.msra.mxu0 %v186
    %503 = vmatpush.msra.mxu0 %v184
    %504 = vmatpush.msra.mxu0 %v182
    %505 = vmatpush.msra.mxu0 %v180
    %506 = vmatmul.f32.gmra.mxu0 %v255
    %v507 = vpop.f32.mrf.mxu0
    %v508 = vadd.f32 %v467, %v507
    %509 = vmatmul.f32.gmra.mxu0 %v258
    %v510 = vpop.f32.mrf.mxu0
    %v511 = vadd.f32 %v470, %v510
    %512 = vmatmul.f32.gmra.mxu0 %v261
    %v513 = vpop.f32.mrf.mxu0
    %v514 = vadd.f32 %v473, %v513
    %515 = vmatmul.f32.gmra.mxu0 %v264
    %v516 = vpop.f32.mrf.mxu0
    %v517 = vadd.f32 %v476, %v516
    %518 = vmatmul.f32.gmra.mxu0 %v267
    %v519 = vpop.f32.mrf.mxu0
    %v520 = vadd.f32 %v479, %v519
    %521 = vmatmul.f32.gmra.mxu0 %v270
    %v522 = vpop.f32.mrf.mxu0
    %v523 = vadd.f32 %v482, %v522
    %524 = vmatmul.f32.gmra.mxu0 %v273
    %v525 = vpop.f32.mrf.mxu0
    %v526 = vadd.f32 %v485, %v525
    %527 = vmatmul.f32.gmra.mxu0 %v276
    %v528 = vpop.f32.mrf.mxu0
    %v529 = vadd.f32 %v488, %v528
    %530 = vdwg.mxu0
    %v531 = vld [vmem:[%s4] sm:$0x3]
    %v533 = vperm.slane %v531, 0
    %v534 = vperm.slane %v531, 1
    %v537 = vadd.f32 %v385, %v533
    %v538 = vadd.f32 %v508, %v534
    %v539 = vadd.f32 %v388, %v533
    %v540 = vadd.f32 %v511, %v534
    %v541 = vadd.f32 %v391, %v533
    %v542 = vadd.f32 %v514, %v534
    %v543 = vadd.f32 %v394, %v533
    %v544 = vadd.f32 %v517, %v534
    %v545 = vadd.f32 %v397, %v533
    %v546 = vadd.f32 %v520, %v534
    %v547 = vadd.f32 %v400, %v533
    %v548 = vadd.f32 %v523, %v534
    %v549 = vadd.f32 %v403, %v533
    %v550 = vadd.f32 %v526, %v534
    %v551 = vadd.f32 %v406, %v533
    %v552 = vadd.f32 %v529, %v534
    %553 = vst [vmem:[#allocation2] sm:$0xff] %v537
    %554 = vst [vmem:[#allocation2 + $0x8] sm:$0xff] %v538
    %555 = vst [vmem:[#allocation2 + $0x10] sm:$0xff] %v539
    %556 = vst [vmem:[#allocation2 + $0x18] sm:$0xff] %v540
    %557 = vst [vmem:[#allocation2 + $0x20] sm:$0xff] %v541
    %558 = vst [vmem:[#allocation2 + $0x28] sm:$0xff] %v542
    %559 = vst [vmem:[#allocation2 + $0x30] sm:$0xff] %v543
    %560 = vst [vmem:[#allocation2 + $0x38] sm:$0xff] %v544
    %561 = vst [vmem:[#allocation2 + $0x40] sm:$0xff] %v545
    %562 = vst [vmem:[#allocation2 + $0x48] sm:$0xff] %v546
    %563 = vst [vmem:[#allocation2 + $0x50] sm:$0xff] %v547
    %564 = vst [vmem:[#allocation2 + $0x58] sm:$0xff] %v548
    %565 = vst [vmem:[#allocation2 + $0x60] sm:$0xff] %v549
    %566 = vst [vmem:[#allocation2 + $0x68] sm:$0xff] %v550
    %567 = vst [vmem:[#allocation2 + $0x70] sm:$0xff] %v551
    %568 = vst [vmem:[#allocation2 + $0x78] sm:$0xff] %v552
    %v569 = vld [vmem:[%s5] sm:$0xff]
    %v570 = vld [vmem:[%s5 + $0x8] sm:$0xff]
    %v571 = vld [vmem:[%s5 + $0x10] sm:$0xff]
    %v572 = vld [vmem:[%s5 + $0x18] sm:$0xff]
    %v573 = vld [vmem:[%s5 + $0x20] sm:$0xff]
    %v574 = vld [vmem:[%s5 + $0x28] sm:$0xff]
    %v575 = vld [vmem:[%s5 + $0x30] sm:$0xff]
    %v576 = vld [vmem:[%s5 + $0x38] sm:$0xff]
    %v577 = vld [vmem:[%s5 + $0x40] sm:$0xff]
    %v578 = vld [vmem:[%s5 + $0x48] sm:$0xff]
    %v579 = vld [vmem:[%s5 + $0x50] sm:$0xff]
    %v580 = vld [vmem:[%s5 + $0x58] sm:$0xff]
    %v581 = vld [vmem:[%s5 + $0x60] sm:$0xff]
    %v582 = vld [vmem:[%s5 + $0x68] sm:$0xff]
    %v583 = vld [vmem:[%s5 + $0x70] sm:$0xff]
    %v584 = vld [vmem:[%s5 + $0x78] sm:$0xff]
    %v585 = vld [vmem:[#allocation8] sm:$0xff]
    %v586 = vld [vmem:[#allocation8 + $0x8] sm:$0xff]
    %v587 = vld [vmem:[#allocation8 + $0x10] sm:$0xff]
    %v588 = vld [vmem:[#allocation8 + $0x18] sm:$0xff]
    %v589 = vld [vmem:[#allocation8 + $0x20] sm:$0xff]
    %v590 = vld [vmem:[#allocation8 + $0x28] sm:$0xff]
    %v591 = vld [vmem:[#allocation8 + $0x30] sm:$0xff]
    %v592 = vld [vmem:[#allocation8 + $0x38] sm:$0xff]
    %v593 = vld [vmem:[#allocation8 + $0x40] sm:$0xff]
    %v594 = vld [vmem:[#allocation8 + $0x48] sm:$0xff]
    %v595 = vld [vmem:[#allocation8 + $0x50] sm:$0xff]
    %v596 = vld [vmem:[#allocation8 + $0x58] sm:$0xff]
    %v597 = vld [vmem:[#allocation8 + $0x60] sm:$0xff]
    %v598 = vld [vmem:[#allocation8 + $0x68] sm:$0xff]
    %v599 = vld [vmem:[#allocation8 + $0x70] sm:$0xff]
    %v600 = vld [vmem:[#allocation8 + $0x78] sm:$0xff]
    %v601 = vld [vmem:[#allocation8 + $0x80] sm:$0xff]
    %v602 = vld [vmem:[#allocation8 + $0x88] sm:$0xff]
    %v603 = vld [vmem:[#allocation8 + $0x90] sm:$0xff]
    %v604 = vld [vmem:[#allocation8 + $0x98] sm:$0xff]
    %v605 = vld [vmem:[#allocation8 + $0xa0] sm:$0xff]
    %v606 = vld [vmem:[#allocation8 + $0xa8] sm:$0xff]
    %v607 = vld [vmem:[#allocation8 + $0xb0] sm:$0xff]
    %v608 = vld [vmem:[#allocation8 + $0xb8] sm:$0xff]
    %v609 = vld [vmem:[#allocation8 + $0xc0] sm:$0xff]
    %v610 = vld [vmem:[#allocation8 + $0xc8] sm:$0xff]
    %v611 = vld [vmem:[#allocation8 + $0xd0] sm:$0xff]
    %v612 = vld [vmem:[#allocation8 + $0xd8] sm:$0xff]
    %v613 = vld [vmem:[#allocation8 + $0xe0] sm:$0xff]
    %v614 = vld [vmem:[#allocation8 + $0xe8] sm:$0xff]
    %v615 = vld [vmem:[#allocation8 + $0xf0] sm:$0xff]
    %v616 = vld [vmem:[#allocation8 + $0xf8] sm:$0xff]
    %v617 = vld [vmem:[%s7] sm:$0x3]
    %v618 = vld [vmem:[#allocation2] sm:$0xff]
    %v619 = vld [vmem:[#allocation2 + $0x8] sm:$0xff]
    %vm620 = vcmask 523264
    %v622 = vsel %vm620, 0.0, 0
    %624 = vmatpush.msra.mxu0 0.0
    %625 = vmatpush.msra.mxu0 0.0
    %626 = vmatpush.msra.mxu0 0.0
    %627 = vmatpush.msra.mxu0 0.0
    %628 = vmatpush.msra.mxu0 0.0
    %629 = vmatpush.msra.mxu0 0.0
    %630 = vmatpush.msra.mxu0 0.0
    %631 = vmatpush.msra.mxu0 0.0
    %632 = vmatpush.msra.mxu0 %v583
    %633 = vmatpush.msra.mxu0 %v581
    %634 = vmatpush.msra.mxu0 %v579
    %635 = vmatpush.msra.mxu0 %v577
    %636 = vmatpush.msra.mxu0 %v575
    %637 = vmatpush.msra.mxu0 %v573
    %638 = vmatpush.msra.mxu0 %v571
    %639 = vmatpush.msra.mxu0 %v569
    %640 = vmatmul.f32.gmra.mxu0 %v622
    %v641 = vpop.f32.mrf.mxu0
    %v642 = vadd.f32 0.0, %v641
    %643 = vdwg.mxu0
    %644 = vmatpush.msra.mxu0 0.0
    %645 = vmatpush.msra.mxu0 0.0
    %646 = vmatpush.msra.mxu0 0.0
    %647 = vmatpush.msra.mxu0 0.0
    %648 = vmatpush.msra.mxu0 0.0
    %649 = vmatpush.msra.mxu0 0.0
    %650 = vmatpush.msra.mxu0 0.0
    %651 = vmatpush.msra.mxu0 0.0
    %652 = vmatpush.msra.mxu0 %v584
    %653 = vmatpush.msra.mxu0 %v582
    %654 = vmatpush.msra.mxu0 %v580
    %655 = vmatpush.msra.mxu0 %v578
    %656 = vmatpush.msra.mxu0 %v576
    %657 = vmatpush.msra.mxu0 %v574
    %658 = vmatpush.msra.mxu0 %v572
    %659 = vmatpush.msra.mxu0 %v570
    %660 = vmatmul.f32.gmra.mxu0 %v622
    %v661 = vpop.f32.mrf.mxu0
    %v662 = vadd.f32 0.0, %v661
    %663 = vdwg.mxu0
    %v664 = vadd.f32 %v618, %v642
    %v665 = vadd.f32 %v619, %v662
    %v666 = vmul.f32 %v664, 0.5
    %v667 = vmul.f32 %v665, 0.5
    %v668 = vtanh.pop %v666
    %v669 = vtanh.pop %v667
    %v670 = vadd.f32 %v668, 1.0
    %v671 = vadd.f32 %v669, 1.0
    %v672 = vmul.f32 %v670, 0.5
    %v673 = vmul.f32 %v671, 0.5
    %v674 = vtanh.pop %v665
    %v675 = vmul.f32 %v672, 0.0
    %677 = vrot.lane.b32.xlu0 %v674, 64
    %v678 = vpop.permute.xlu0 %677
    %v680 = vmul.f32 %v672, %v678
    %682 = vrot.lane.b32.xlu0 %v680, 64
    %v683 = vpop.permute.xlu0 %682
    %v685 = vadd.f32 %v675, %v683
    %v686 = vtanh.pop %v685
    %688 = vrot.lane.b32.xlu0 %v686, 64
    %v689 = vpop.permute.xlu0 %688
    %v691 = vmul.f32 %v673, %v689
    %v692 = vsel %vm620, %v691, 0.0
    %v694 = vperm.slane %v617, 0
    %v695 = vperm.slane %v617, 1
    %698 = vmatpush.msra.mxu0 %v615
    %699 = vmatpush.msra.mxu0 %v613
    %700 = vmatpush.msra.mxu0 %v611
    %701 = vmatpush.msra.mxu0 %v609
    %702 = vmatpush.msra.mxu0 %v607
    %703 = vmatpush.msra.mxu0 %v605
    %704 = vmatpush.msra.mxu0 %v603
    %705 = vmatpush.msra.mxu0 %v601
    %706 = vmatpush.msra.mxu0 %v599
    %707 = vmatpush.msra.mxu0 %v597
    %708 = vmatpush.msra.mxu0 %v595
    %709 = vmatpush.msra.mxu0 %v593
    %710 = vmatpush.msra.mxu0 %v591
    %711 = vmatpush.msra.mxu0 %v589
    %712 = vmatpush.msra.mxu0 %v587
    %713 = vmatpush.msra.mxu0 %v585
    %714 = vmatmul.f32.gmra.mxu0 %v692
    %v715 = vpop.f32.mrf.mxu0
    %v716 = vadd.f32 %v694, %v715
    %717 = vdwg.mxu0
    %718 = vmatpush.msra.mxu0 %v616
    %719 = vmatpush.msra.mxu0 %v614
    %720 = vmatpush.msra.mxu0 %v612
    %721 = vmatpush.msra.mxu0 %v610
    %722 = vmatpush.msra.mxu0 %v608
    %723 = vmatpush.msra.mxu0 %v606
    %724 = vmatpush.msra.mxu0 %v604
    %725 = vmatpush.msra.mxu0 %v602
    %726 = vmatpush.msra.mxu0 %v600
    %727 = vmatpush.msra.mxu0 %v598
    %728 = vmatpush.msra.mxu0 %v596
    %729 = vmatpush.msra.mxu0 %v594
    %730 = vmatpush.msra.mxu0 %v592
    %731 = vmatpush.msra.mxu0 %v590
    %732 = vmatpush.msra.mxu0 %v588
    %733 = vmatpush.msra.mxu0 %v586
    %734 = vmatmul.f32.gmra.mxu0 %v692
    %v735 = vpop.f32.mrf.mxu0
    %v736 = vadd.f32 %v695, %v735
    %737 = vdwg.mxu0
    %v738 = vmul.f32 %v716, 0.5
    %v739 = vmul.f32 %v736, 0.5
    %v740 = vtanh.pop %v738
    %v741 = vtanh.pop %v739
    %v742 = vadd.f32 %v740, 1.0
    %v743 = vadd.f32 %v741, 1.0
    %v744 = vmul.f32 %v742, 0.5
    %v745 = vmul.f32 %v743, 0.5
    %v746 = vtanh.pop %v736
    %v747 = vmul.f32 %v744, 0.0
    %749 = vrot.lane.b32.xlu0 %v746, 64
    %v750 = vpop.permute.xlu0 %749
    %v752 = vmul.f32 %v744, %v750
    %754 = vrot.lane.b32.xlu0 %v752, 64
    %v755 = vpop.permute.xlu0 %754
    %v757 = vadd.f32 %v747, %v755
    %v758 = vtanh.pop %v757
    %760 = vrot.lane.b32.xlu0 %v758, 64
    %v761 = vpop.permute.xlu0 %760
    %v763 = vmul.f32 %v745, %v761
    %v764 = vld [vmem:[#allocation2 + $0x10] sm:$0xff]
    %v765 = vld [vmem:[#allocation2 + $0x18] sm:$0xff]
    %v767 = vsel %vm620, %v691, 0
    %769 = vmatpush.msra.mxu0 0.0
    %770 = vmatpush.msra.mxu0 0.0
    %771 = vmatpush.msra.mxu0 0.0
    %772 = vmatpush.msra.mxu0 0.0
    %773 = vmatpush.msra.mxu0 0.0
    %774 = vmatpush.msra.mxu0 0.0
    %775 = vmatpush.msra.mxu0 0.0
    %776 = vmatpush.msra.mxu0 0.0
    %777 = vmatpush.msra.mxu0 %v583
    %778 = vmatpush.msra.mxu0 %v581
    %779 = vmatpush.msra.mxu0 %v579
    %780 = vmatpush.msra.mxu0 %v577
    %781 = vmatpush.msra.mxu0 %v575
    %782 = vmatpush.msra.mxu0 %v573
    %783 = vmatpush.msra.mxu0 %v571
    %784 = vmatpush.msra.mxu0 %v569
    %785 = vmatmul.f32.gmra.mxu0 %v767
    %v786 = vpop.f32.mrf.mxu0
    %v787 = vadd.f32 0.0, %v786
    %788 = vdwg.mxu0
    %789 = vmatpush.msra.mxu0 0.0
    %790 = vmatpush.msra.mxu0 0.0
    %791 = vmatpush.msra.mxu0 0.0
    %792 = vmatpush.msra.mxu0 0.0
    %793 = vmatpush.msra.mxu0 0.0
    %794 = vmatpush.msra.mxu0 0.0
    %795 = vmatpush.msra.mxu0 0.0
    %796 = vmatpush.msra.mxu0 0.0
    %797 = vmatpush.msra.mxu0 %v584
    %798 = vmatpush.msra.mxu0 %v582
    %799 = vmatpush.msra.mxu0 %v580
    %800 = vmatpush.msra.mxu0 %v578
    %801 = vmatpush.msra.mxu0 %v576
    %802 = vmatpush.msra.mxu0 %v574
    %803 = vmatpush.msra.mxu0 %v572
    %804 = vmatpush.msra.mxu0 %v570
    %805 = vmatmul.f32.gmra.mxu0 %v767
    %v806 = vpop.f32.mrf.mxu0
    %v807 = vadd.f32 0.0, %v806
    %808 = vdwg.mxu0
    %v809 = vadd.f32 %v764, %v787
    %v810 = vadd.f32 %v765, %v807
    %v811 = vmul.f32 %v809, 0.5
    %v812 = vmul.f32 %v810, 0.5
    %v813 = vtanh.pop %v811
    %v814 = vtanh.pop %v812
    %v815 = vadd.f32 %v813, 1.0
    %v816 = vadd.f32 %v814, 1.0
    %v817 = vmul.f32 %v815, 0.5
    %v818 = vmul.f32 %v816, 0.5
    %v819 = vtanh.pop %v810
    %v820 = vmul.f32 %v817, %v685
    %822 = vrot.lane.b32.xlu0 %v819, 64
    %v823 = vpop.permute.xlu0 %822
    %v825 = vmul.f32 %v817, %v823
    %827 = vrot.lane.b32.xlu0 %v825, 64
    %v828 = vpop.permute.xlu0 %827
    %v830 = vadd.f32 %v820, %v828
    %v831 = vtanh.pop %v830
    %833 = vrot.lane.b32.xlu0 %v831, 64
    %v834 = vpop.permute.xlu0 %833
    %v836 = vmul.f32 %v818, %v834
    %838 = vrot.lane.b32.xlu0 %v763, 64
    %v839 = vpop.permute.xlu0 %838
    %v841 = vsel %vm620, %v836, %v839
    %842 = vmatpush.msra.mxu0 %v615
    %843 = vmatpush.msra.mxu0 %v613
    %844 = vmatpush.msra.mxu0 %v611
    %845 = vmatpush.msra.mxu0 %v609
    %846 = vmatpush.msra.mxu0 %v607
    %847 = vmatpush.msra.mxu0 %v605
    %848 = vmatpush.msra.mxu0 %v603
    %849 = vmatpush.msra.mxu0 %v601
    %850 = vmatpush.msra.mxu0 %v599
    %851 = vmatpush.msra.mxu0 %v597
    %852 = vmatpush.msra.mxu0 %v595
    %853 = vmatpush.msra.mxu0 %v593
    %854 = vmatpush.msra.mxu0 %v591
    %855 = vmatpush.msra.mxu0 %v589
    %856 = vmatpush.msra.mxu0 %v587
    %857 = vmatpush.msra.mxu0 %v585
    %858 = vmatmul.f32.gmra.mxu0 %v841
    %v859 = vpop.f32.mrf.mxu0
    %v860 = vadd.f32 %v694, %v859
    %861 = vdwg.mxu0
    %862 = vmatpush.msra.mxu0 %v616
    %863 = vmatpush.msra.mxu0 %v614
    %864 = vmatpush.msra.mxu0 %v612
    %865 = vmatpush.msra.mxu0 %v610
    %866 = vmatpush.msra.mxu0 %v608
    %867 = vmatpush.msra.mxu0 %v606
    %868 = vmatpush.msra.mxu0 %v604
    %869 = vmatpush.msra.mxu0 %v602
    %870 = vmatpush.msra.mxu0 %v600
    %871 = vmatpush.msra.mxu0 %v598
    %872 = vmatpush.msra.mxu0 %v596
    %873 = vmatpush.msra.mxu0 %v594
    %874 = vmatpush.msra.mxu0 %v592
    %875 = vmatpush.msra.mxu0 %v590
    %876 = vmatpush.msra.mxu0 %v588
    %877 = vmatpush.msra.mxu0 %v586
    %878 = vmatmul.f32.gmra.mxu0 %v841
    %v879 = vpop.f32.mrf.mxu0
    %v880 = vadd.f32 %v695, %v879
    %881 = vdwg.mxu0
    %v882 = vmul.f32 %v860, 0.5
    %v883 = vmul.f32 %v880, 0.5
    %v884 = vtanh.pop %v882
    %v885 = vtanh.pop %v883
    %v886 = vadd.f32 %v884, 1.0
    %v887 = vadd.f32 %v885, 1.0
    %v888 = vmul.f32 %v886, 0.5
    %v889 = vmul.f32 %v887, 0.5
    %v890 = vtanh.pop %v880
    %v891 = vmul.f32 %v888, %v757
    %893 = vrot.lane.b32.xlu0 %v890, 64
    %v894 = vpop.permute.xlu0 %893
    %v896 = vmul.f32 %v888, %v894
    %898 = vrot.lane.b32.xlu0 %v896, 64
    %v899 = vpop.permute.xlu0 %898
    %v901 = vadd.f32 %v891, %v899
    %v902 = vtanh.pop %v901
    %904 = vrot.lane.b32.xlu0 %v902, 64
    %v905 = vpop.permute.xlu0 %904
    %v907 = vmul.f32 %v889, %v905
    %v908 = vld [vmem:[#allocation2 + $0x20] sm:$0xff]
    %v909 = vld [vmem:[#allocation2 + $0x28] sm:$0xff]
    %v911 = vsel %vm620, %v836, 0
    %913 = vmatpush.msra.mxu0 0.0
    %914 = vmatpush.msra.mxu0 0.0
    %915 = vmatpush.msra.mxu0 0.0
    %916 = vmatpush.msra.mxu0 0.0
    %917 = vmatpush.msra.mxu0 0.0
    %918 = vmatpush.msra.mxu0 0.0
    %919 = vmatpush.msra.mxu0 0.0
    %920 = vmatpush.msra.mxu0 0.0
    %921 = vmatpush.msra.mxu0 %v583
    %922 = vmatpush.msra.mxu0 %v581
    %923 = vmatpush.msra.mxu0 %v579
    %924 = vmatpush.msra.mxu0 %v577
    %925 = vmatpush.msra.mxu0 %v575
    %926 = vmatpush.msra.mxu0 %v573
    %927 = vmatpush.msra.mxu0 %v571
    %928 = vmatpush.msra.mxu0 %v569
    %929 = vmatmul.f32.gmra.mxu0 %v911
    %v930 = vpop.f32.mrf.mxu0
    %v931 = vadd.f32 0.0, %v930
    %932 = vdwg.mxu0
    %933 = vmatpush.msra.mxu0 0.0
    %934 = vmatpush.msra.mxu0 0.0
    %935 = vmatpush.msra.mxu0 0.0
    %936 = vmatpush.msra.mxu0 0.0
    %937 = vmatpush.msra.mxu0 0.0
    %938 = vmatpush.msra.mxu0 0.0
    %939 = vmatpush.msra.mxu0 0.0
    %940 = vmatpush.msra.mxu0 0.0
    %941 = vmatpush.msra.mxu0 %v584
    %942 = vmatpush.msra.mxu0 %v582
    %943 = vmatpush.msra.mxu0 %v580
    %944 = vmatpush.msra.mxu0 %v578
    %945 = vmatpush.msra.mxu0 %v576
    %946 = vmatpush.msra.mxu0 %v574
    %947 = vmatpush.msra.mxu0 %v572
    %948 = vmatpush.msra.mxu0 %v570
    %949 = vmatmul.f32.gmra.mxu0 %v911
    %v950 = vpop.f32.mrf.mxu0
    %v951 = vadd.f32 0.0, %v950
    %952 = vdwg.mxu0
    %v953 = vadd.f32 %v908, %v931
    %v954 = vadd.f32 %v909, %v951
    %v955 = vmul.f32 %v953, 0.5
    %v956 = vmul.f32 %v954, 0.5
    %v957 = vtanh.pop %v955
    %v958 = vtanh.pop %v956
    %v959 = vadd.f32 %v957, 1.0
    %v960 = vadd.f32 %v958, 1.0
    %v961 = vmul.f32 %v959, 0.5
    %v962 = vmul.f32 %v960, 0.5
    %v963 = vtanh.pop %v954
    %v964 = vmul.f32 %v961, %v830
    %966 = vrot.lane.b32.xlu0 %v963, 64
    %v967 = vpop.permute.xlu0 %966
    %v969 = vmul.f32 %v961, %v967
    %971 = vrot.lane.b32.xlu0 %v969, 64
    %v972 = vpop.permute.xlu0 %971
    %v974 = vadd.f32 %v964, %v972
    %v975 = vtanh.pop %v974
    %977 = vrot.lane.b32.xlu0 %v975, 64
    %v978 = vpop.permute.xlu0 %977
    %v980 = vmul.f32 %v962, %v978
    %982 = vrot.lane.b32.xlu0 %v907, 64
    %v983 = vpop.permute.xlu0 %982
    %v985 = vsel %vm620, %v980, %v983
    %986 = vmatpush.msra.mxu0 %v615
    %987 = vmatpush.msra.mxu0 %v613
    %988 = vmatpush.msra.mxu0 %v611
    %989 = vmatpush.msra.mxu0 %v609
    %990 = vmatpush.msra.mxu0 %v607
    %991 = vmatpush.msra.mxu0 %v605
    %992 = vmatpush.msra.mxu0 %v603
    %993 = vmatpush.msra.mxu0 %v601
    %994 = vmatpush.msra.mxu0 %v599
    %995 = vmatpush.msra.mxu0 %v597
    %996 = vmatpush.msra.mxu0 %v595
    %997 = vmatpush.msra.mxu0 %v593
    %998 = vmatpush.msra.mxu0 %v591
    %999 = vmatpush.msra.mxu0 %v589
    %1000 = vmatpush.msra.mxu0 %v587
    %1001 = vmatpush.msra.mxu0 %v585
    %1002 = vmatmul.f32.gmra.mxu0 %v985
    %v1003 = vpop.f32.mrf.mxu0
    %v1004 = vadd.f32 %v694, %v1003
    %1005 = vdwg.mxu0
    %1006 = vmatpush.msra.mxu0 %v616
    %1007 = vmatpush.msra.mxu0 %v614
    %1008 = vmatpush.msra.mxu0 %v612
    %1009 = vmatpush.msra.mxu0 %v610
    %1010 = vmatpush.msra.mxu0 %v608
    %1011 = vmatpush.msra.mxu0 %v606
    %1012 = vmatpush.msra.mxu0 %v604
    %1013 = vmatpush.msra.mxu0 %v602
    %1014 = vmatpush.msra.mxu0 %v600
    %1015 = vmatpush.msra.mxu0 %v598
    %1016 = vmatpush.msra.mxu0 %v596
    %1017 = vmatpush.msra.mxu0 %v594
    %1018 = vmatpush.msra.mxu0 %v592
    %1019 = vmatpush.msra.mxu0 %v590
    %1020 = vmatpush.msra.mxu0 %v588
    %1021 = vmatpush.msra.mxu0 %v586
    %1022 = vmatmul.f32.gmra.mxu0 %v985
    %v1023 = vpop.f32.mrf.mxu0
    %v1024 = vadd.f32 %v695, %v1023
    %1025 = vdwg.mxu0
    %v1026 = vmul.f32 %v1004, 0.5
    %v1027 = vmul.f32 %v1024, 0.5
    %v1028 = vtanh.pop %v1026
    %v1029 = vtanh.pop %v1027
    %v1030 = vadd.f32 %v1028, 1.0
    %v1031 = vadd.f32 %v1029, 1.0
    %v1032 = vmul.f32 %v1030, 0.5
    %v1033 = vmul.f32 %v1031, 0.5
    %v1034 = vtanh.pop %v1024
    %v1035 = vmul.f32 %v1032, %v901
    %1037 = vrot.lane.b32.xlu0 %v1034, 64
    %v1038 = vpop.permute.xlu0 %1037
    %v1040 = vmul.f32 %v1032, %v1038
    %1042 = vrot.lane.b32.xlu0 %v1040, 64
    %v1043 = vpop.permute.xlu0 %1042
    %v1045 = vadd.f32 %v1035, %v1043
    %v1046 = vtanh.pop %v1045
    %1048 = vrot.lane.b32.xlu0 %v1046, 64
    %v1049 = vpop.permute.xlu0 %1048
    %v1051 = vmul.f32 %v1033, %v1049
    %v1052 = vld [vmem:[#allocation2 + $0x30] sm:$0xff]
    %v1053 = vld [vmem:[#allocation2 + $0x38] sm:$0xff]
    %v1055 = vsel %vm620, %v980, 0
    %1057 = vmatpush.msra.mxu0 0.0
    %1058 = vmatpush.msra.mxu0 0.0
    %1059 = vmatpush.msra.mxu0 0.0
    %1060 = vmatpush.msra.mxu0 0.0
    %1061 = vmatpush.msra.mxu0 0.0
    %1062 = vmatpush.msra.mxu0 0.0
    %1063 = vmatpush.msra.mxu0 0.0
    %1064 = vmatpush.msra.mxu0 0.0
    %1065 = vmatpush.msra.mxu0 %v583
    %1066 = vmatpush.msra.mxu0 %v581
    %1067 = vmatpush.msra.mxu0 %v579
    %1068 = vmatpush.msra.mxu0 %v577
    %1069 = vmatpush.msra.mxu0 %v575
    %1070 = vmatpush.msra.mxu0 %v573
    %1071 = vmatpush.msra.mxu0 %v571
    %1072 = vmatpush.msra.mxu0 %v569
    %1073 = vmatmul.f32.gmra.mxu0 %v1055
    %v1074 = vpop.f32.mrf.mxu0
    %v1075 = vadd.f32 0.0, %v1074
    %1076 = vdwg.mxu0
    %1077 = vmatpush.msra.mxu0 0.0
    %1078 = vmatpush.msra.mxu0 0.0
    %1079 = vmatpush.msra.mxu0 0.0
    %1080 = vmatpush.msra.mxu0 0.0
    %1081 = vmatpush.msra.mxu0 0.0
    %1082 = vmatpush.msra.mxu0 0.0
    %1083 = vmatpush.msra.mxu0 0.0
    %1084 = vmatpush.msra.mxu0 0.0
    %1085 = vmatpush.msra.mxu0 %v584
    %1086 = vmatpush.msra.mxu0 %v582
    %1087 = vmatpush.msra.mxu0 %v580
    %1088 = vmatpush.msra.mxu0 %v578
    %1089 = vmatpush.msra.mxu0 %v576
    %1090 = vmatpush.msra.mxu0 %v574
    %1091 = vmatpush.msra.mxu0 %v572
    %1092 = vmatpush.msra.mxu0 %v570
    %1093 = vmatmul.f32.gmra.mxu0 %v1055
    %v1094 = vpop.f32.mrf.mxu0
    %v1095 = vadd.f32 0.0, %v1094
    %1096 = vdwg.mxu0
    %v1097 = vadd.f32 %v1052, %v1075
    %v1098 = vadd.f32 %v1053, %v1095
    %v1099 = vmul.f32 %v1097, 0.5
    %v1100 = vmul.f32 %v1098, 0.5
    %v1101 = vtanh.pop %v1099
    %v1102 = vtanh.pop %v1100
    %v1103 = vadd.f32 %v1101, 1.0
    %v1104 = vadd.f32 %v1102, 1.0
    %v1105 = vmul.f32 %v1103, 0.5
    %v1106 = vmul.f32 %v1104, 0.5
    %v1107 = vtanh.pop %v1098
    %v1108 = vmul.f32 %v1105, %v974
    %1110 = vrot.lane.b32.xlu0 %v1107, 64
    %v1111 = vpop.permute.xlu0 %1110
    %v1113 = vmul.f32 %v1105, %v1111
    %1115 = vrot.lane.b32.xlu0 %v1113, 64
    %v1116 = vpop.permute.xlu0 %1115
    %v1118 = vadd.f32 %v1108, %v1116
    %v1119 = vtanh.pop %v1118
    %1121 = vrot.lane.b32.xlu0 %v1119, 64
    %v1122 = vpop.permute.xlu0 %1121
    %v1124 = vmul.f32 %v1106, %v1122
    %1126 = vrot.lane.b32.xlu0 %v1051, 64
    %v1127 = vpop.permute.xlu0 %1126
    %v1129 = vsel %vm620, %v1124, %v1127
    %1130 = vmatpush.msra.mxu0 %v615
    %1131 = vmatpush.msra.mxu0 %v613
    %1132 = vmatpush.msra.mxu0 %v611
    %1133 = vmatpush.msra.mxu0 %v609
    %1134 = vmatpush.msra.mxu0 %v607
    %1135 = vmatpush.msra.mxu0 %v605
    %1136 = vmatpush.msra.mxu0 %v603
    %1137 = vmatpush.msra.mxu0 %v601
    %1138 = vmatpush.msra.mxu0 %v599
    %1139 = vmatpush.msra.mxu0 %v597
    %1140 = vmatpush.msra.mxu0 %v595
    %1141 = vmatpush.msra.mxu0 %v593
    %1142 = vmatpush.msra.mxu0 %v591
    %1143 = vmatpush.msra.mxu0 %v589
    %1144 = vmatpush.msra.mxu0 %v587
    %1145 = vmatpush.msra.mxu0 %v585
    %1146 = vmatmul.f32.gmra.mxu0 %v1129
    %v1147 = vpop.f32.mrf.mxu0
    %v1148 = vadd.f32 %v694, %v1147
    %1149 = vdwg.mxu0
    %1150 = vmatpush.msra.mxu0 %v616
    %1151 = vmatpush.msra.mxu0 %v614
    %1152 = vmatpush.msra.mxu0 %v612
    %1153 = vmatpush.msra.mxu0 %v610
    %1154 = vmatpush.msra.mxu0 %v608
    %1155 = vmatpush.msra.mxu0 %v606
    %1156 = vmatpush.msra.mxu0 %v604
    %1157 = vmatpush.msra.mxu0 %v602
    %1158 = vmatpush.msra.mxu0 %v600
    %1159 = vmatpush.msra.mxu0 %v598
    %1160 = vmatpush.msra.mxu0 %v596
    %1161 = vmatpush.msra.mxu0 %v594
    %1162 = vmatpush.msra.mxu0 %v592
    %1163 = vmatpush.msra.mxu0 %v590
    %1164 = vmatpush.msra.mxu0 %v588
    %1165 = vmatpush.msra.mxu0 %v586
    %1166 = vmatmul.f32.gmra.mxu0 %v1129
    %v1167 = vpop.f32.mrf.mxu0
    %v1168 = vadd.f32 %v695, %v1167
    %1169 = vdwg.mxu0
    %v1170 = vmul.f32 %v1148, 0.5
    %v1171 = vmul.f32 %v1168, 0.5
    %v1172 = vtanh.pop %v1170
    %v1173 = vtanh.pop %v1171
    %v1174 = vadd.f32 %v1172, 1.0
    %v1175 = vadd.f32 %v1173, 1.0
    %v1176 = vmul.f32 %v1174, 0.5
    %v1177 = vmul.f32 %v1175, 0.5
    %v1178 = vtanh.pop %v1168
    %v1179 = vmul.f32 %v1176, %v1045
    %1181 = vrot.lane.b32.xlu0 %v1178, 64
    %v1182 = vpop.permute.xlu0 %1181
    %v1184 = vmul.f32 %v1176, %v1182
    %1186 = vrot.lane.b32.xlu0 %v1184, 64
    %v1187 = vpop.permute.xlu0 %1186
    %v1189 = vadd.f32 %v1179, %v1187
    %v1190 = vtanh.pop %v1189
    %1192 = vrot.lane.b32.xlu0 %v1190, 64
    %v1193 = vpop.permute.xlu0 %1192
    %v1195 = vmul.f32 %v1177, %v1193
    %v1196 = vld [vmem:[#allocation2 + $0x40] sm:$0xff]
    %v1197 = vld [vmem:[#allocation2 + $0x48] sm:$0xff]
    %v1199 = vsel %vm620, %v1124, 0
    %1201 = vmatpush.msra.mxu0 0.0
    %1202 = vmatpush.msra.mxu0 0.0
    %1203 = vmatpush.msra.mxu0 0.0
    %1204 = vmatpush.msra.mxu0 0.0
    %1205 = vmatpush.msra.mxu0 0.0
    %1206 = vmatpush.msra.mxu0 0.0
    %1207 = vmatpush.msra.mxu0 0.0
    %1208 = vmatpush.msra.mxu0 0.0
    %1209 = vmatpush.msra.mxu0 %v583
    %1210 = vmatpush.msra.mxu0 %v581
    %1211 = vmatpush.msra.mxu0 %v579
    %1212 = vmatpush.msra.mxu0 %v577
    %1213 = vmatpush.msra.mxu0 %v575
    %1214 = vmatpush.msra.mxu0 %v573
    %1215 = vmatpush.msra.mxu0 %v571
    %1216 = vmatpush.msra.mxu0 %v569
    %1217 = vmatmul.f32.gmra.mxu0 %v1199
    %v1218 = vpop.f32.mrf.mxu0
    %v1219 = vadd.f32 0.0, %v1218
    %1220 = vdwg.mxu0
    %1221 = vmatpush.msra.mxu0 0.0
    %1222 = vmatpush.msra.mxu0 0.0
    %1223 = vmatpush.msra.mxu0 0.0
    %1224 = vmatpush.msra.mxu0 0.0
    %1225 = vmatpush.msra.mxu0 0.0
    %1226 = vmatpush.msra.mxu0 0.0
    %1227 = vmatpush.msra.mxu0 0.0
    %1228 = vmatpush.msra.mxu0 0.0
    %1229 = vmatpush.msra.mxu0 %v584
    %1230 = vmatpush.msra.mxu0 %v582
    %1231 = vmatpush.msra.mxu0 %v580
    %1232 = vmatpush.msra.mxu0 %v578
    %1233 = vmatpush.msra.mxu0 %v576
    %1234 = vmatpush.msra.mxu0 %v574
    %1235 = vmatpush.msra.mxu0 %v572
    %1236 = vmatpush.msra.mxu0 %v570
    %1237 = vmatmul.f32.gmra.mxu0 %v1199
    %v1238 = vpop.f32.mrf.mxu0
    %v1239 = vadd.f32 0.0, %v1238
    %1240 = vdwg.mxu0
    %v1241 = vadd.f32 %v1196, %v1219
    %v1242 = vadd.f32 %v1197, %v1239
    %v1243 = vmul.f32 %v1241, 0.5
    %v1244 = vmul.f32 %v1242, 0.5
    %v1245 = vtanh.pop %v1243
    %v1246 = vtanh.pop %v1244
    %v1247 = vadd.f32 %v1245, 1.0
    %v1248 = vadd.f32 %v1246, 1.0
    %v1249 = vmul.f32 %v1247, 0.5
    %v1250 = vmul.f32 %v1248, 0.5
    %v1251 = vtanh.pop %v1242
    %v1252 = vmul.f32 %v1249, %v1118
    %1254 = vrot.lane.b32.xlu0 %v1251, 64
    %v1255 = vpop.permute.xlu0 %1254
    %v1257 = vmul.f32 %v1249, %v1255
    %1259 = vrot.lane.b32.xlu0 %v1257, 64
    %v1260 = vpop.permute.xlu0 %1259
    %v1262 = vadd.f32 %v1252, %v1260
    %v1263 = vtanh.pop %v1262
    %1265 = vrot.lane.b32.xlu0 %v1263, 64
    %v1266 = vpop.permute.xlu0 %1265
    %v1268 = vmul.f32 %v1250, %v1266
    %1270 = vrot.lane.b32.xlu0 %v1195, 64
    %v1271 = vpop.permute.xlu0 %1270
    %v1273 = vsel %vm620, %v1268, %v1271
    %1274 = vmatpush.msra.mxu0 %v615
    %1275 = vmatpush.msra.mxu0 %v613
    %1276 = vmatpush.msra.mxu0 %v611
    %1277 = vmatpush.msra.mxu0 %v609
    %1278 = vmatpush.msra.mxu0 %v607
    %1279 = vmatpush.msra.mxu0 %v605
    %1280 = vmatpush.msra.mxu0 %v603
    %1281 = vmatpush.msra.mxu0 %v601
    %1282 = vmatpush.msra.mxu0 %v599
    %1283 = vmatpush.msra.mxu0 %v597
    %1284 = vmatpush.msra.mxu0 %v595
    %1285 = vmatpush.msra.mxu0 %v593
    %1286 = vmatpush.msra.mxu0 %v591
    %1287 = vmatpush.msra.mxu0 %v589
    %1288 = vmatpush.msra.mxu0 %v587
    %1289 = vmatpush.msra.mxu0 %v585
    %1290 = vmatmul.f32.gmra.mxu0 %v1273
    %v1291 = vpop.f32.mrf.mxu0
    %v1292 = vadd.f32 %v694, %v1291
    %1293 = vdwg.mxu0
    %1294 = vmatpush.msra.mxu0 %v616
    %1295 = vmatpush.msra.mxu0 %v614
    %1296 = vmatpush.msra.mxu0 %v612
    %1297 = vmatpush.msra.mxu0 %v610
    %1298 = vmatpush.msra.mxu0 %v608
    %1299 = vmatpush.msra.mxu0 %v606
    %1300 = vmatpush.msra.mxu0 %v604
    %1301 = vmatpush.msra.mxu0 %v602
    %1302 = vmatpush.msra.mxu0 %v600
    %1303 = vmatpush.msra.mxu0 %v598
    %1304 = vmatpush.msra.mxu0 %v596
    %1305 = vmatpush.msra.mxu0 %v594
    %1306 = vmatpush.msra.mxu0 %v592
    %1307 = vmatpush.msra.mxu0 %v590
    %1308 = vmatpush.msra.mxu0 %v588
    %1309 = vmatpush.msra.mxu0 %v586
    %1310 = vmatmul.f32.gmra.mxu0 %v1273
    %v1311 = vpop.f32.mrf.mxu0
    %v1312 = vadd.f32 %v695, %v1311
    %1313 = vdwg.mxu0
    %v1314 = vmul.f32 %v1292, 0.5
    %v1315 = vmul.f32 %v1312, 0.5
    %v1316 = vtanh.pop %v1314
    %v1317 = vtanh.pop %v1315
    %v1318 = vadd.f32 %v1316, 1.0
    %v1319 = vadd.f32 %v1317, 1.0
    %v1320 = vmul.f32 %v1318, 0.5
    %v1321 = vmul.f32 %v1319, 0.5
    %v1322 = vtanh.pop %v1312
    %v1323 = vmul.f32 %v1320, %v1189
    %1325 = vrot.lane.b32.xlu0 %v1322, 64
    %v1326 = vpop.permute.xlu0 %1325
    %v1328 = vmul.f32 %v1320, %v1326
    %1330 = vrot.lane.b32.xlu0 %v1328, 64
    %v1331 = vpop.permute.xlu0 %1330
    %v1333 = vadd.f32 %v1323, %v1331
    %v1334 = vtanh.pop %v1333
    %1336 = vrot.lane.b32.xlu0 %v1334, 64
    %v1337 = vpop.permute.xlu0 %1336
    %v1339 = vmul.f32 %v1321, %v1337
    %v1340 = vld [vmem:[#allocation2 + $0x50] sm:$0xff]
    %v1341 = vld [vmem:[#allocation2 + $0x58] sm:$0xff]
    %v1343 = vsel %vm620, %v1268, 0
    %1345 = vmatpush.msra.mxu0 0.0
    %1346 = vmatpush.msra.mxu0 0.0
    %1347 = vmatpush.msra.mxu0 0.0
    %1348 = vmatpush.msra.mxu0 0.0
    %1349 = vmatpush.msra.mxu0 0.0
    %1350 = vmatpush.msra.mxu0 0.0
    %1351 = vmatpush.msra.mxu0 0.0
    %1352 = vmatpush.msra.mxu0 0.0
    %1353 = vmatpush.msra.mxu0 %v583
    %1354 = vmatpush.msra.mxu0 %v581
    %1355 = vmatpush.msra.mxu0 %v579
    %1356 = vmatpush.msra.mxu0 %v577
    %1357 = vmatpush.msra.mxu0 %v575
    %1358 = vmatpush.msra.mxu0 %v573
    %1359 = vmatpush.msra.mxu0 %v571
    %1360 = vmatpush.msra.mxu0 %v569
    %1361 = vmatmul.f32.gmra.mxu0 %v1343
    %v1362 = vpop.f32.mrf.mxu0
    %v1363 = vadd.f32 0.0, %v1362
    %1364 = vdwg.mxu0
    %1365 = vmatpush.msra.mxu0 0.0
    %1366 = vmatpush.msra.mxu0 0.0
    %1367 = vmatpush.msra.mxu0 0.0
    %1368 = vmatpush.msra.mxu0 0.0
    %1369 = vmatpush.msra.mxu0 0.0
    %1370 = vmatpush.msra.mxu0 0.0
    %1371 = vmatpush.msra.mxu0 0.0
    %1372 = vmatpush.msra.mxu0 0.0
    %1373 = vmatpush.msra.mxu0 %v584
    %1374 = vmatpush.msra.mxu0 %v582
    %1375 = vmatpush.msra.mxu0 %v580
    %1376 = vmatpush.msra.mxu0 %v578
    %1377 = vmatpush.msra.mxu0 %v576
    %1378 = vmatpush.msra.mxu0 %v574
    %1379 = vmatpush.msra.mxu0 %v572
    %1380 = vmatpush.msra.mxu0 %v570
    %1381 = vmatmul.f32.gmra.mxu0 %v1343
    %v1382 = vpop.f32.mrf.mxu0
    %v1383 = vadd.f32 0.0, %v1382
    %1384 = vdwg.mxu0
    %v1385 = vadd.f32 %v1340, %v1363
    %v1386 = vadd.f32 %v1341, %v1383
    %v1387 = vmul.f32 %v1385, 0.5
    %v1388 = vmul.f32 %v1386, 0.5
    %v1389 = vtanh.pop %v1387
    %v1390 = vtanh.pop %v1388
    %v1391 = vadd.f32 %v1389, 1.0
    %v1392 = vadd.f32 %v1390, 1.0
    %v1393 = vmul.f32 %v1391, 0.5
    %v1394 = vmul.f32 %v1392, 0.5
    %v1395 = vtanh.pop %v1386
    %v1396 = vmul.f32 %v1393, %v1262
    %1398 = vrot.lane.b32.xlu0 %v1395, 64
    %v1399 = vpop.permute.xlu0 %1398
    %v1401 = vmul.f32 %v1393, %v1399
    %1403 = vrot.lane.b32.xlu0 %v1401, 64
    %v1404 = vpop.permute.xlu0 %1403
    %v1406 = vadd.f32 %v1396, %v1404
    %v1407 = vtanh.pop %v1406
    %1409 = vrot.lane.b32.xlu0 %v1407, 64
    %v1410 = vpop.permute.xlu0 %1409
    %v1412 = vmul.f32 %v1394, %v1410
    %1414 = vrot.lane.b32.xlu0 %v1339, 64
    %v1415 = vpop.permute.xlu0 %1414
    %v1417 = vsel %vm620, %v1412, %v1415
    %1418 = vmatpush.msra.mxu0 %v615
    %1419 = vmatpush.msra.mxu0 %v613
    %1420 = vmatpush.msra.mxu0 %v611
    %1421 = vmatpush.msra.mxu0 %v609
    %1422 = vmatpush.msra.mxu0 %v607
    %1423 = vmatpush.msra.mxu0 %v605
    %1424 = vmatpush.msra.mxu0 %v603
    %1425 = vmatpush.msra.mxu0 %v601
    %1426 = vmatpush.msra.mxu0 %v599
    %1427 = vmatpush.msra.mxu0 %v597
    %1428 = vmatpush.msra.mxu0 %v595
    %1429 = vmatpush.msra.mxu0 %v593
    %1430 = vmatpush.msra.mxu0 %v591
    %1431 = vmatpush.msra.mxu0 %v589
    %1432 = vmatpush.msra.mxu0 %v587
    %1433 = vmatpush.msra.mxu0 %v585
    %1434 = vmatmul.f32.gmra.mxu0 %v1417
    %v1435 = vpop.f32.mrf.mxu0
    %v1436 = vadd.f32 %v694, %v1435
    %1437 = vdwg.mxu0
    %1438 = vmatpush.msra.mxu0 %v616
    %1439 = vmatpush.msra.mxu0 %v614
    %1440 = vmatpush.msra.mxu0 %v612
    %1441 = vmatpush.msra.mxu0 %v610
    %1442 = vmatpush.msra.mxu0 %v608
    %1443 = vmatpush.msra.mxu0 %v606
    %1444 = vmatpush.msra.mxu0 %v604
    %1445 = vmatpush.msra.mxu0 %v602
    %1446 = vmatpush.msra.mxu0 %v600
    %1447 = vmatpush.msra.mxu0 %v598
    %1448 = vmatpush.msra.mxu0 %v596
    %1449 = vmatpush.msra.mxu0 %v594
    %1450 = vmatpush.msra.mxu0 %v592
    %1451 = vmatpush.msra.mxu0 %v590
    %1452 = vmatpush.msra.mxu0 %v588
    %1453 = vmatpush.msra.mxu0 %v586
    %1454 = vmatmul.f32.gmra.mxu0 %v1417
    %v1455 = vpop.f32.mrf.mxu0
    %v1456 = vadd.f32 %v695, %v1455
    %1457 = vdwg.mxu0
    %v1458 = vmul.f32 %v1436, 0.5
    %v1459 = vmul.f32 %v1456, 0.5
    %v1460 = vtanh.pop %v1458
    %v1461 = vtanh.pop %v1459
    %v1462 = vadd.f32 %v1460, 1.0
    %v1463 = vadd.f32 %v1461, 1.0
    %v1464 = vmul.f32 %v1462, 0.5
    %v1465 = vmul.f32 %v1463, 0.5
    %v1466 = vtanh.pop %v1456
    %v1467 = vmul.f32 %v1464, %v1333
    %1469 = vrot.lane.b32.xlu0 %v1466, 64
    %v1470 = vpop.permute.xlu0 %1469
    %v1472 = vmul.f32 %v1464, %v1470
    %1474 = vrot.lane.b32.xlu0 %v1472, 64
    %v1475 = vpop.permute.xlu0 %1474
    %v1477 = vadd.f32 %v1467, %v1475
    %v1478 = vtanh.pop %v1477
    %1480 = vrot.lane.b32.xlu0 %v1478, 64
    %v1481 = vpop.permute.xlu0 %1480
    %v1483 = vmul.f32 %v1465, %v1481
    %v1484 = vld [vmem:[#allocation2 + $0x60] sm:$0xff]
    %v1485 = vld [vmem:[#allocation2 + $0x68] sm:$0xff]
    %v1487 = vsel %vm620, %v1412, 0
    %1489 = vmatpush.msra.mxu0 0.0
    %1490 = vmatpush.msra.mxu0 0.0
    %1491 = vmatpush.msra.mxu0 0.0
    %1492 = vmatpush.msra.mxu0 0.0
    %1493 = vmatpush.msra.mxu0 0.0
    %1494 = vmatpush.msra.mxu0 0.0
    %1495 = vmatpush.msra.mxu0 0.0
    %1496 = vmatpush.msra.mxu0 0.0
    %1497 = vmatpush.msra.mxu0 %v583
    %1498 = vmatpush.msra.mxu0 %v581
    %1499 = vmatpush.msra.mxu0 %v579
    %1500 = vmatpush.msra.mxu0 %v577
    %1501 = vmatpush.msra.mxu0 %v575
    %1502 = vmatpush.msra.mxu0 %v573
    %1503 = vmatpush.msra.mxu0 %v571
    %1504 = vmatpush.msra.mxu0 %v569
    %1505 = vmatmul.f32.gmra.mxu0 %v1487
    %v1506 = vpop.f32.mrf.mxu0
    %v1507 = vadd.f32 0.0, %v1506
    %1508 = vdwg.mxu0
    %1509 = vmatpush.msra.mxu0 0.0
    %1510 = vmatpush.msra.mxu0 0.0
    %1511 = vmatpush.msra.mxu0 0.0
    %1512 = vmatpush.msra.mxu0 0.0
    %1513 = vmatpush.msra.mxu0 0.0
    %1514 = vmatpush.msra.mxu0 0.0
    %1515 = vmatpush.msra.mxu0 0.0
    %1516 = vmatpush.msra.mxu0 0.0
    %1517 = vmatpush.msra.mxu0 %v584
    %1518 = vmatpush.msra.mxu0 %v582
    %1519 = vmatpush.msra.mxu0 %v580
    %1520 = vmatpush.msra.mxu0 %v578
    %1521 = vmatpush.msra.mxu0 %v576
    %1522 = vmatpush.msra.mxu0 %v574
    %1523 = vmatpush.msra.mxu0 %v572
    %1524 = vmatpush.msra.mxu0 %v570
    %1525 = vmatmul.f32.gmra.mxu0 %v1487
    %v1526 = vpop.f32.mrf.mxu0
    %v1527 = vadd.f32 0.0, %v1526
    %1528 = vdwg.mxu0
    %v1529 = vadd.f32 %v1484, %v1507
    %v1530 = vadd.f32 %v1485, %v1527
    %v1531 = vmul.f32 %v1529, 0.5
    %v1532 = vmul.f32 %v1530, 0.5
    %v1533 = vtanh.pop %v1531
    %v1534 = vtanh.pop %v1532
    %v1535 = vadd.f32 %v1533, 1.0
    %v1536 = vadd.f32 %v1534, 1.0
    %v1537 = vmul.f32 %v1535, 0.5
    %v1538 = vmul.f32 %v1536, 0.5
    %v1539 = vtanh.pop %v1530
    %v1540 = vmul.f32 %v1537, %v1406
    %1542 = vrot.lane.b32.xlu0 %v1539, 64
    %v1543 = vpop.permute.xlu0 %1542
    %v1545 = vmul.f32 %v1537, %v1543
    %1547 = vrot.lane.b32.xlu0 %v1545, 64
    %v1548 = vpop.permute.xlu0 %1547
    %v1550 = vadd.f32 %v1540, %v1548
    %v1551 = vtanh.pop %v1550
    %1553 = vrot.lane.b32.xlu0 %v1551, 64
    %v1554 = vpop.permute.xlu0 %1553
    %v1556 = vmul.f32 %v1538, %v1554
    %1558 = vrot.lane.b32.xlu0 %v1483, 64
    %v1559 = vpop.permute.xlu0 %1558
    %v1561 = vsel %vm620, %v1556, %v1559
    %1562 = vmatpush.msra.mxu0 %v615
    %1563 = vmatpush.msra.mxu0 %v613
    %1564 = vmatpush.msra.mxu0 %v611
    %1565 = vmatpush.msra.mxu0 %v609
    %1566 = vmatpush.msra.mxu0 %v607
    %1567 = vmatpush.msra.mxu0 %v605
    %1568 = vmatpush.msra.mxu0 %v603
    %1569 = vmatpush.msra.mxu0 %v601
    %1570 = vmatpush.msra.mxu0 %v599
    %1571 = vmatpush.msra.mxu0 %v597
    %1572 = vmatpush.msra.mxu0 %v595
    %1573 = vmatpush.msra.mxu0 %v593
    %1574 = vmatpush.msra.mxu0 %v591
    %1575 = vmatpush.msra.mxu0 %v589
    %1576 = vmatpush.msra.mxu0 %v587
    %1577 = vmatpush.msra.mxu0 %v585
    %1578 = vmatmul.f32.gmra.mxu0 %v1561
    %v1579 = vpop.f32.mrf.mxu0
    %v1580 = vadd.f32 %v694, %v1579
    %1581 = vdwg.mxu0
    %1582 = vmatpush.msra.mxu0 %v616
    %1583 = vmatpush.msra.mxu0 %v614
    %1584 = vmatpush.msra.mxu0 %v612
    %1585 = vmatpush.msra.mxu0 %v610
    %1586 = vmatpush.msra.mxu0 %v608
    %1587 = vmatpush.msra.mxu0 %v606
    %1588 = vmatpush.msra.mxu0 %v604
    %1589 = vmatpush.msra.mxu0 %v602
    %1590 = vmatpush.msra.mxu0 %v600
    %1591 = vmatpush.msra.mxu0 %v598
    %1592 = vmatpush.msra.mxu0 %v596
    %1593 = vmatpush.msra.mxu0 %v594
    %1594 = vmatpush.msra.mxu0 %v592
    %1595 = vmatpush.msra.mxu0 %v590
    %1596 = vmatpush.msra.mxu0 %v588
    %1597 = vmatpush.msra.mxu0 %v586
    %1598 = vmatmul.f32.gmra.mxu0 %v1561
    %v1599 = vpop.f32.mrf.mxu0
    %v1600 = vadd.f32 %v695, %v1599
    %1601 = vdwg.mxu0
    %v1602 = vmul.f32 %v1580, 0.5
    %v1603 = vmul.f32 %v1600, 0.5
    %v1604 = vtanh.pop %v1602
    %v1605 = vtanh.pop %v1603
    %v1606 = vadd.f32 %v1604, 1.0
    %v1607 = vadd.f32 %v1605, 1.0
    %v1608 = vmul.f32 %v1606, 0.5
    %v1609 = vmul.f32 %v1607, 0.5
    %v1610 = vtanh.pop %v1600
    %v1611 = vmul.f32 %v1608, %v1477
    %1613 = vrot.lane.b32.xlu0 %v1610, 64
    %v1614 = vpop.permute.xlu0 %1613
    %v1616 = vmul.f32 %v1608, %v1614
    %1618 = vrot.lane.b32.xlu0 %v1616, 64
    %v1619 = vpop.permute.xlu0 %1618
    %v1621 = vadd.f32 %v1611, %v1619
    %v1622 = vtanh.pop %v1621
    %1624 = vrot.lane.b32.xlu0 %v1622, 64
    %v1625 = vpop.permute.xlu0 %1624
    %v1627 = vmul.f32 %v1609, %v1625
    %v1628 = vld [vmem:[#allocation2 + $0x70] sm:$0xff]
    %v1629 = vld [vmem:[#allocation2 + $0x78] sm:$0xff]
    %v1631 = vsel %vm620, %v1556, 0
    %1633 = vmatpush.msra.mxu0 0.0
    %1634 = vmatpush.msra.mxu0 0.0
    %1635 = vmatpush.msra.mxu0 0.0
    %1636 = vmatpush.msra.mxu0 0.0
    %1637 = vmatpush.msra.mxu0 0.0
    %1638 = vmatpush.msra.mxu0 0.0
    %1639 = vmatpush.msra.mxu0 0.0
    %1640 = vmatpush.msra.mxu0 0.0
    %1641 = vmatpush.msra.mxu0 %v583
    %1642 = vmatpush.msra.mxu0 %v581
    %1643 = vmatpush.msra.mxu0 %v579
    %1644 = vmatpush.msra.mxu0 %v577
    %1645 = vmatpush.msra.mxu0 %v575
    %1646 = vmatpush.msra.mxu0 %v573
    %1647 = vmatpush.msra.mxu0 %v571
    %1648 = vmatpush.msra.mxu0 %v569
    %1649 = vmatmul.f32.gmra.mxu0 %v1631
    %v1650 = vpop.f32.mrf.mxu0
    %v1651 = vadd.f32 0.0, %v1650
    %1652 = vdwg.mxu0
    %1653 = vmatpush.msra.mxu0 0.0
    %1654 = vmatpush.msra.mxu0 0.0
    %1655 = vmatpush.msra.mxu0 0.0
    %1656 = vmatpush.msra.mxu0 0.0
    %1657 = vmatpush.msra.mxu0 0.0
    %1658 = vmatpush.msra.mxu0 0.0
    %1659 = vmatpush.msra.mxu0 0.0
    %1660 = vmatpush.msra.mxu0 0.0
    %1661 = vmatpush.msra.mxu0 %v584
    %1662 = vmatpush.msra.mxu0 %v582
    %1663 = vmatpush.msra.mxu0 %v580
    %1664 = vmatpush.msra.mxu0 %v578
    %1665 = vmatpush.msra.mxu0 %v576
    %1666 = vmatpush.msra.mxu0 %v574
    %1667 = vmatpush.msra.mxu0 %v572
    %1668 = vmatpush.msra.mxu0 %v570
    %1669 = vmatmul.f32.gmra.mxu0 %v1631
    %v1670 = vpop.f32.mrf.mxu0
    %v1671 = vadd.f32 0.0, %v1670
    %1672 = vdwg.mxu0
    %v1673 = vadd.f32 %v1628, %v1651
    %v1674 = vadd.f32 %v1629, %v1671
    %v1675 = vmul.f32 %v1673, 0.5
    %v1676 = vmul.f32 %v1674, 0.5
    %v1677 = vtanh.pop %v1675
    %v1678 = vtanh.pop %v1676
    %v1679 = vadd.f32 %v1677, 1.0
    %v1680 = vadd.f32 %v1678, 1.0
    %v1681 = vmul.f32 %v1679, 0.5
    %v1682 = vmul.f32 %v1680, 0.5
    %v1683 = vtanh.pop %v1674
    %v1684 = vmul.f32 %v1681, %v1550
    %1686 = vrot.lane.b32.xlu0 %v1683, 64
    %v1687 = vpop.permute.xlu0 %1686
    %v1689 = vmul.f32 %v1681, %v1687
    %1691 = vrot.lane.b32.xlu0 %v1689, 64
    %v1692 = vpop.permute.xlu0 %1691
    %v1694 = vadd.f32 %v1684, %v1692
    %v1695 = vtanh.pop %v1694
    %1697 = vrot.lane.b32.xlu0 %v1695, 64
    %v1698 = vpop.permute.xlu0 %1697
    %v1700 = vmul.f32 %v1682, %v1698
    %1702 = vrot.lane.b32.xlu0 %v1627, 64
    %v1703 = vpop.permute.xlu0 %1702
    %v1705 = vsel %vm620, %v1700, %v1703
    %1706 = vmatpush.msra.mxu0 %v615
    %1707 = vmatpush.msra.mxu0 %v613
    %1708 = vmatpush.msra.mxu0 %v611
    %1709 = vmatpush.msra.mxu0 %v609
    %1710 = vmatpush.msra.mxu0 %v607
    %1711 = vmatpush.msra.mxu0 %v605
    %1712 = vmatpush.msra.mxu0 %v603
    %1713 = vmatpush.msra.mxu0 %v601
    %1714 = vmatpush.msra.mxu0 %v599
    %1715 = vmatpush.msra.mxu0 %v597
    %1716 = vmatpush.msra.mxu0 %v595
    %1717 = vmatpush.msra.mxu0 %v593
    %1718 = vmatpush.msra.mxu0 %v591
    %1719 = vmatpush.msra.mxu0 %v589
    %1720 = vmatpush.msra.mxu0 %v587
    %1721 = vmatpush.msra.mxu0 %v585
    %1722 = vmatmul.f32.gmra.mxu0 %v1705
    %v1723 = vpop.f32.mrf.mxu0
    %v1724 = vadd.f32 %v694, %v1723
    %1725 = vdwg.mxu0
    %1726 = vmatpush.msra.mxu0 %v616
    %1727 = vmatpush.msra.mxu0 %v614
    %1728 = vmatpush.msra.mxu0 %v612
    %1729 = vmatpush.msra.mxu0 %v610
    %1730 = vmatpush.msra.mxu0 %v608
    %1731 = vmatpush.msra.mxu0 %v606
    %1732 = vmatpush.msra.mxu0 %v604
    %1733 = vmatpush.msra.mxu0 %v602
    %1734 = vmatpush.msra.mxu0 %v600
    %1735 = vmatpush.msra.mxu0 %v598
    %1736 = vmatpush.msra.mxu0 %v596
    %1737 = vmatpush.msra.mxu0 %v594
    %1738 = vmatpush.msra.mxu0 %v592
    %1739 = vmatpush.msra.mxu0 %v590
    %1740 = vmatpush.msra.mxu0 %v588
    %1741 = vmatpush.msra.mxu0 %v586
    %1742 = vmatmul.f32.gmra.mxu0 %v1705
    %v1743 = vpop.f32.mrf.mxu0
    %v1744 = vadd.f32 %v695, %v1743
    %1745 = vdwg.mxu0
    %v1746 = vmul.f32 %v1724, 0.5
    %v1747 = vmul.f32 %v1744, 0.5
    %v1748 = vtanh.pop %v1746
    %v1749 = vtanh.pop %v1747
    %v1750 = vadd.f32 %v1748, 1.0
    %v1751 = vadd.f32 %v1749, 1.0
    %v1752 = vmul.f32 %v1750, 0.5
    %v1753 = vmul.f32 %v1751, 0.5
    %v1754 = vtanh.pop %v1744
    %v1755 = vmul.f32 %v1752, %v1621
    %1757 = vrot.lane.b32.xlu0 %v1754, 64
    %v1758 = vpop.permute.xlu0 %1757
    %v1760 = vmul.f32 %v1752, %v1758
    %1762 = vrot.lane.b32.xlu0 %v1760, 64
    %v1763 = vpop.permute.xlu0 %1762
    %v1765 = vadd.f32 %v1755, %v1763
    %v1766 = vtanh.pop %v1765
    %1768 = vrot.lane.b32.xlu0 %v1766, 64
    %v1769 = vpop.permute.xlu0 %1768
    %v1771 = vmul.f32 %v1753, %v1769
    %v1772 = vld [vmem:[%s8] sm:$0xff]
    %v1773 = vld [vmem:[%s8 + $0x8] sm:$0xff]
    %v1774 = vld [vmem:[%s8 + $0x10] sm:$0xff]
    %v1775 = vld [vmem:[%s8 + $0x18] sm:$0xff]
    %v1776 = vld [vmem:[%s8 + $0x20] sm:$0xff]
    %v1777 = vld [vmem:[%s8 + $0x28] sm:$0xff]
    %v1778 = vld [vmem:[%s8 + $0x30] sm:$0xff]
    %v1779 = vld [vmem:[%s8 + $0x38] sm:$0xff]
    %v1780 = vld [vmem:[%s9] sm:$0x1]
    %v1782 = vperm.slane %v1780, 0
    %v1785 = vsel %vm620, %v1771, 0
    %1787 = vmatpush.msra.mxu0 0.0
    %1788 = vmatpush.msra.mxu0 0.0
    %1789 = vmatpush.msra.mxu0 0.0
    %1790 = vmatpush.msra.mxu0 0.0
    %1791 = vmatpush.msra.mxu0 0.0
    %1792 = vmatpush.msra.mxu0 0.0
    %1793 = vmatpush.msra.mxu0 0.0
    %1794 = vmatpush.msra.mxu0 0.0
    %1795 = vmatpush.msra.mxu0 %v1779
    %1796 = vmatpush.msra.mxu0 %v1778
    %1797 = vmatpush.msra.mxu0 %v1777
    %1798 = vmatpush.msra.mxu0 %v1776
    %1799 = vmatpush.msra.mxu0 %v1775
    %1800 = vmatpush.msra.mxu0 %v1774
    %1801 = vmatpush.msra.mxu0 %v1773
    %1802 = vmatpush.msra.mxu0 %v1772
    %1803 = vmatmul.f32.gmra.mxu0 %v1785
    %v1804 = vpop.f32.mrf.mxu0
    %v1805 = vadd.f32 %v1782, %v1804
    %1806 = vdwg.mxu0
    %vm1807 = vcmask 195584
    %1808 = vst.msk [vmem:[#allocation9] sm:$0xff] %vm1807, %v1805
    // Predicated region
    $region54: #{tpu_custom_call.1} parent=1 // pred_check
      _
    $region55: #{tpu_custom_call.1} parent=1 // pred_check_branch
      %1810 = sbr.rel (0) target = $region57
    $region56: #{tpu_custom_call.1} parent=1 // pred_region
      %1812 = vsyncadd [#allocation5], 0
      %s1814 = sshll.u32 [#allocation9], 4
      %s1815 = int_to_ptr.vmem [resolvable:$true] %s1814
      %s1816 = sshll.u32 %s10, 4
      %s1817 = int_to_ptr.hbm [resolvable:$true] %s1816
      %1819 = dma.vmem_to_hbm [thread:$0]  %s1815, 128, %s1817, [#allocation5]
    $region57: #{tpu_custom_call.1} parent=1 // pred_fallthru
      _
    // Predicated region
    $region58: #{tpu_custom_call.1} parent=1 // pred_check
      _
    $region59: #{tpu_custom_call.1} parent=1 // pred_check_branch
      %1821 = sbr.rel (0) target = $region61
    $region60: #{tpu_custom_call.1} parent=1 // pred_region
      %1823 = dma.done [#allocation5], 128
    $region61: #{tpu_custom_call.1} parent=1 // pred_fallthru
      _
    %1824 = vsyncpa [#allocation4], 1
    %1825 = vsyncpa [#allocation7], 1
    %1826 = vsyncpa [#allocation5], 1

</llo_original>
